<compile_context>
chip_gen: v6e
topology: v6e:2x2x1
jax: 0.10.0
libtpu: 0.0.40
codegen_flags: <defaults>
</compile_context>

<pallas_src>
import functools

import jax
import jax.numpy as jnp
from jax.experimental import pallas as pl
from jax.experimental.pallas import tpu as pltpu


# ------------------------------ Pallas kernel -------------------------------


def _acb_kernel(x_ref, w_ref, b_ref, o_ref, pad_ref, slab_ref, *,
                k, p, h, w, w_pad, h_out, w_out):
    """One (image, C_out-tile) step of the fused ACB (k,k) convolution.

    x_ref   : (1, C_in, H*W)            unpadded image, spatial dims flattened.
    w_ref   : (CO_T, k*k*C_in)  bf16    packed fused weights (tap-major rows).
    b_ref   : (CO_T, 1)         f32     fused bias (BN shifts of all three branches).
    o_ref   : (1, CO_T, H_out*W_out)    compact flat output block.
    pad_ref : (C_in, H_pad*W_pad+k-1)   bf16 VMEM scratch: zero-padded flat plane.
    slab_ref: (k*k*C_in, H_out*W_pad)   bf16 VMEM scratch: im2col slab (built at co==0).
    """
    co = pl.program_id(1)
    c_in = x_ref.shape[1]
    hw = h * w
    g_wide = h_out * w_pad

    @pl.when(co == 0)
    def _build_slab():
        # Zero-padded, flattened image plane (row stride w_pad, k-1 trailing zeros),
        # cast to bf16 on the way into VMEM (no HBM-side cast / pad round trip).
        pad_ref[...] = jnp.zeros(pad_ref.shape, pad_ref.dtype)
        if p == 0:
            pad_ref[:, :hw] = x_ref[0].astype(pad_ref.dtype)
        else:
            for r in range(h):
                dst = (r + p) * w_pad + p
                pad_ref[:, dst:dst + w] = x_ref[0, :, r * w:(r + 1) * w].astype(pad_ref.dtype)
        # Mini im2col: one lane-shifted copy of the padded plane per (kh, kw) tap, so
        # the whole k*k-tap reduction becomes a single matmul with K = k*k*C_in.
        for kh in range(k):
            for kw in range(k):
                t = kh * k + kw
                off = kh * w_pad + kw
                slab_ref[t * c_in:(t + 1) * c_in, :] = pad_ref[:, off:off + g_wide]

    # Single deep-K MXU matmul (bf16 x bf16 -> f32 accumulation inside the MXU).
    acc = jnp.dot(w_ref[...], slab_ref[...], preferred_element_type=jnp.float32)
    acc = acc + b_ref[...]                                     # bias added once, post-dot

    # Compact the "wide" rows (stride w_pad) into the contiguous output layout; the
    # k-1 wrap-around garbage columns per row are never written to HBM.
    for oh in range(h_out):
        o_ref[0, :, oh * w_out:(oh + 1) * w_out] = (
            acc[:, oh * w_pad:oh * w_pad + w_out].astype(o_ref.dtype))


def _fused_conv2d(x, w_fused, b_fused, *, kernel_size, padding, co_tile_max=256):
    """Runs the single fused (k,k) conv (stride 1, zero padding) with Pallas."""
    k, p = kernel_size, padding
    n, c_in, h, w = x.shape
    c_out = w_fused.shape[0]
    h_pad, w_pad = h + 2 * p, w + 2 * p
    h_out, w_out = h_pad - k + 1, w_pad - k + 1
    assert h_out > 0 and w_out > 0
    l_pad = h_pad * w_pad + (k - 1)          # padded flat plane + slack for tap shifts
    g_wide = h_out * w_pad                   # "wide" output row layout used internally
    kk_cin = k * k * c_in

    # C_out tiling: full if small, otherwise 256-wide tiles (MXU-native, multiple of 8).
    co_tile = c_out if c_out <= co_tile_max else co_tile_max
    n_co = pl.cdiv(c_out, co_tile)

    # Pack fused weights tap-major to match the slab row order; bf16 for the MXU.
    w_packed = jnp.transpose(w_fused, (0, 2, 3, 1)).reshape(c_out, kk_cin)
    w_packed = w_packed.astype(jnp.bfloat16)
    b_col = b_fused.reshape(c_out, 1).astype(jnp.float32)

    x_flat = x.reshape(n, c_in, h * w)       # free reshape; padding happens in-kernel

    kernel = functools.partial(_acb_kernel, k=k, p=p, h=h, w=w,
                               w_pad=w_pad, h_out=h_out, w_out=w_out)

    out_flat = pl.pallas_call(
        kernel,
        out_shape=jax.ShapeDtypeStruct((n, c_out, h_out * w_out), x.dtype),
        grid_spec=pltpu.PrefetchScalarGridSpec(
            num_scalar_prefetch=0,
            grid=(n, n_co),
            in_specs=[
                pl.BlockSpec((1, c_in, h * w), lambda i, j: (i, 0, 0)),   # per-image plane
                pl.BlockSpec((co_tile, kk_cin), lambda i, j: (j, 0)),     # weight tile
                pl.BlockSpec((co_tile, 1), lambda i, j: (j, 0)),          # bias tile
            ],
            out_specs=pl.BlockSpec((1, co_tile, h_out * w_out), lambda i, j: (i, j, 0)),
            scratch_shapes=[
                pltpu.VMEM((c_in, l_pad), jnp.bfloat16),      # padded flat plane
                pltpu.VMEM((kk_cin, g_wide), jnp.bfloat16),   # im2col slab
            ],
        ),
        compiler_params=pltpu.CompilerParams(
            dimension_semantics=("parallel", "arbitrary"),
            vmem_limit_bytes=64 * 1024 * 1024,
        ),
    )(x_flat, w_packed, b_col)

    # Free reshape back to NCHW (compact layout was written directly by the kernel).
    return out_flat.reshape(n, c_out, h_out, w_out)


# --------------------- ACB branch + BatchNorm folding -----------------------


def _bn_scale_shift(params, prefix, c_out, with_bn, eps):
    if not with_bn:
        return jnp.ones((c_out,), jnp.float32), jnp.zeros((c_out,), jnp.float32)
    gamma = params[prefix + "_gamma"].astype(jnp.float32)
    beta = params[prefix + "_beta"].astype(jnp.float32)
    mean = params[prefix + "_mean"].astype(jnp.float32)
    var = params[prefix + "_var"].astype(jnp.float32)
    s = gamma * jax.lax.rsqrt(var + eps)
    return s, beta - s * mean


def acb_conv2d_forward(x, params, *, kernel_size, padding, with_bn=True, eps=1e-5):
    """ACBConv2d.forward (deploy=False): square + vertical + horizontal conv branches,
    each followed by inference-mode BatchNorm, summed.

    Supported configuration (the one the module is used with): stride=1, dilation=1,
    groups=1, padding_mode='zeros'.
    """
    # TODO(synk): training-mode BatchNorm (batch statistics) is not implemented; BN uses
    # running statistics (eval semantics) and is folded into the conv.
    k = kernel_size
    p = padding
    assert k % 2 == 1
    # The PyTorch module itself only supports these paddings (CropLayer asserts).
    assert p == 0 or p >= k // 2, "ACBConv2d requires padding == 0 or padding >= k//2"

    w_sq = params["square_w"].astype(jnp.float32)    # (C_out, C_in, k, k)
    w_ver = params["ver_w"].astype(jnp.float32)      # (C_out, C_in, k, 1)
    w_hor = params["hor_w"].astype(jnp.float32)      # (C_out, C_in, 1, k)
    c_out = w_sq.shape[0]

    s_sq, t_sq = _bn_scale_shift(params, "square", c_out, with_bn, eps)
    s_ver, t_ver = _bn_scale_shift(params, "ver", c_out, with_bn, eps)
    s_hor, t_hor = _bn_scale_shift(params, "hor", c_out, with_bn, eps)

    # Exact ACB fusion: the BN-scaled (k,1) / (1,k) kernels land in the centre column /
    # row of the BN-scaled square kernel.  The CropLayer / asymmetric paddings of the
    # ver & hor branches reduce exactly to this index shift for zeros padding.
    w_fused = w_sq * s_sq[:, None, None, None]
    w_fused = w_fused.at[:, :, :, k // 2].add(w_ver[:, :, :, 0] * s_ver[:, None, None])
    w_fused = w_fused.at[:, :, k // 2, :].add(w_hor[:, :, 0, :] * s_hor[:, None, None])
    b_fused = t_sq + t_ver + t_hor

    return _fused_conv2d(x, w_fused, b_fused, kernel_size=k, padding=p)


# ---------------------- Pure-JAX reference (validation) ---------------------


def acb_reference(x, params, *, kernel_size, padding, with_bn=True, eps=1e-5):
    """Mirrors the PyTorch forward literally: crop layers, three convs, eval BN, sum."""
    k = kernel_size
    p = padding
    c = p - k // 2  # center_offset_from_origin_border
    prec = jax.lax.Precision.HIGHEST

    def conv(inp, wgt, pad_hw):
        return jax.lax.conv_general_dilated(
            inp, wgt, window_strides=(1, 1), padding=pad_hw,
            dimension_numbers=("NCHW", "OIHW", "NCHW"), precision=prec)

    sq = conv(x, params["square_w"], ((p, p), (p, p)))
    if c >= 0:
        ver = conv(x, params["ver_w"], ((p, p), (c, c)))
        hor = conv(x, params["hor_w"], ((c, c), (p, p)))
    else:
        ver = conv(x[:, :, :, -c:c], params["ver_w"], ((0, 0), (0, 0)))   # CropLayer (cols)
        hor = conv(x[:, :, -c:c, :], params["hor_w"], ((0, 0), (0, 0)))   # CropLayer (rows)

    def bn(y, prefix):
        if not with_bn:
            return y
        g = params[prefix + "_gamma"]
        b = params[prefix + "_beta"]
        m = params[prefix + "_mean"]
        v = params[prefix + "_var"]
        s = g / jnp.sqrt(v + eps)
        return y * s[None, :, None, None] + (b - s * m)[None, :, None, None]

    return bn(sq, "square") + bn(ver, "ver") + bn(hor, "hor")


# ----------------------------------- main ------------------------------------


if __name__ == "__main__":
    key = jax.random.PRNGKey(0)
    n, c_in, c_out, h, w = 2, 4, 8, 16, 16
    k = 3

    ks = jax.random.split(key, 16)
    x = jax.random.normal(ks[0], (n, c_in, h, w), dtype=jnp.float32)
    # Snap x to the bf16 grid so the in-kernel bf16 cast is exact; the only quantization
    # delta vs. the HIGHEST-precision f32 reference then comes from the bf16 weights.
    x = x.astype(jnp.bfloat16).astype(jnp.float32)

    params = {
        "square_w": 0.2 * jax.random.normal(ks[1], (c_out, c_in, k, k), jnp.float32),
        "ver_w": 0.2 * jax.random.normal(ks[2], (c_out, c_in, k, 1), jnp.float32),
        "hor_w": 0.2 * jax.random.normal(ks[3], (c_out, c_in, 1, k), jnp.float32),
    }
    for i, prefix in enumerate(("square", "ver", "hor")):
        params[prefix + "_gamma"] = 1.0 + 0.1 * jax.random.normal(ks[4 + i], (c_out,), jnp.float32)
        params[prefix + "_beta"] = 0.1 * jax.random.normal(ks[7 + i], (c_out,), jnp.float32)
        params[prefix + "_mean"] = 0.1 * jax.random.normal(ks[10 + i], (c_out,), jnp.float32)
        params[prefix + "_var"] = jax.random.uniform(ks[13 + i], (c_out,), jnp.float32, 0.5, 1.5)

    # padding=1: the usual "same padding" ACB config (crop layers are Identity).
    # padding=0: the config where CropLayer actually crops (fused into the conv here).
    for padding in (1, 0):
        out = acb_conv2d_forward(x, params, kernel_size=k, padding=padding)
        out = jax.block_until_ready(out)
        ref = acb_reference(x, params, kernel_size=k, padding=padding)
        assert out.shape == ref.shape, (out.shape, ref.shape)
        max_err = float(jnp.max(jnp.abs(out - ref)))
        # Tolerance accounts for bf16 weights on the MXU vs. HIGHEST-precision f32 ref
        # (accumulation is f32 via preferred_element_type).
        assert jnp.allclose(out, ref, atol=3e-2, rtol=3e-2), f"max abs err = {max_err}"

    print("KERNEL_OK")
</pallas_src>

<mosaic_0001>
module attributes {stable_mosaic.version = 11 : i64} {
  func.func @_acb_kernel(%arg0: i32, %arg1: i32, %arg2: memref<1x4x256xf32, #tpu.memory_space<vmem>>, %arg3: memref<8x36xbf16, #tpu.memory_space<vmem>>, %arg4: memref<8x1xf32, #tpu.memory_space<vmem>>, %arg5: memref<1x8x256xf32, #tpu.memory_space<vmem>>, %arg6: memref<4x326xbf16, #tpu.memory_space<vmem>>, %arg7: memref<36x288xbf16, #tpu.memory_space<vmem>>) attributes {dimension_semantics = [#tpu.dimension_semantics<parallel>, #tpu.dimension_semantics<arbitrary>], iteration_bounds = array<i64: 2, 1>, scalar_prefetch = 0 : i64, scratch_operands = 2 : i64, tpu.core_type = #tpu.core_type<tc>, window_params = [{transform_indices = @transform_0, window_bounds = array<i64: 1, 4, 256>}, {transform_indices = @transform_1, window_bounds = array<i64: 8, 36>}, {transform_indices = @transform_2, window_bounds = array<i64: 8, 1>}, {transform_indices = @transform_3, window_bounds = array<i64: 1, 8, 256>}]} {
    %c0_i32 = arith.constant 0 : i32
    %0 = arith.cmpi eq, %arg1, %c0_i32 : i32
    %1 = arith.extui %0 : i1 to i32
    %c0_i32_0 = arith.constant 0 : i32
    %2 = arith.cmpi ne, %1, %c0_i32_0 : i32
    scf.if %2 {
      %cst_39 = arith.constant 0.000000e+00 : bf16
      %73 = vector.broadcast %cst_39 : bf16 to vector<4x326xbf16>
      %c0_40 = arith.constant 0 : index
      %c0_41 = arith.constant 0 : index
      %74 = vector.load %arg6[%c0_40, %c0_41] : memref<4x326xbf16, #tpu.memory_space<vmem>>, vector<4x326xbf16>
      tpu.vector_store %arg6[%c0_40, %c0_41], %73 {strides = array<i32>} : memref<4x326xbf16, #tpu.memory_space<vmem>>, vector<4x326xbf16>,
      %c0_42 = arith.constant 0 : index
      %c0_43 = arith.constant 0 : index
      %c0_44 = arith.constant 0 : index
      %75 = vector.load %arg2[%c0_42, %c0_43, %c0_44] : memref<1x4x256xf32, #tpu.memory_space<vmem>>, vector<1x4x16xf32>
      %76 = vector.shape_cast %75 : vector<1x4x16xf32> to vector<4x16xf32>
      %77 = arith.truncf %76 : vector<4x16xf32> to vector<4x16xbf16>
      %c0_45 = arith.constant 0 : index
      %c19 = arith.constant 19 : index
      %78 = vector.load %arg6[%c0_45, %c19] : memref<4x326xbf16, #tpu.memory_space<vmem>>, vector<4x16xbf16>
      tpu.vector_store %arg6[%c0_45, %c19], %77 {strides = array<i32>} : memref<4x326xbf16, #tpu.memory_space<vmem>>, vector<4x16xbf16>,
      %c0_46 = arith.constant 0 : index
      %c0_47 = arith.constant 0 : index
      %c16_48 = arith.constant 16 : index
      %79 = vector.load %arg2[%c0_46, %c0_47, %c16_48] : memref<1x4x256xf32, #tpu.memory_space<vmem>>, vector<1x4x16xf32>
      %80 = vector.shape_cast %79 : vector<1x4x16xf32> to vector<4x16xf32>
      %81 = arith.truncf %80 : vector<4x16xf32> to vector<4x16xbf16>
      %c0_49 = arith.constant 0 : index
      %c37 = arith.constant 37 : index
      %82 = vector.load %arg6[%c0_49, %c37] : memref<4x326xbf16, #tpu.memory_space<vmem>>, vector<4x16xbf16>
      tpu.vector_store %arg6[%c0_49, %c37], %81 {strides = array<i32>} : memref<4x326xbf16, #tpu.memory_space<vmem>>, vector<4x16xbf16>,
      %c0_50 = arith.constant 0 : index
      %c0_51 = arith.constant 0 : index
      %c32_52 = arith.constant 32 : index
      %83 = vector.load %arg2[%c0_50, %c0_51, %c32_52] : memref<1x4x256xf32, #tpu.memory_space<vmem>>, vector<1x4x16xf32>
      %84 = vector.shape_cast %83 : vector<1x4x16xf32> to vector<4x16xf32>
      %85 = arith.truncf %84 : vector<4x16xf32> to vector<4x16xbf16>
      %c0_53 = arith.constant 0 : index
      %c55 = arith.constant 55 : index
      %86 = vector.load %arg6[%c0_53, %c55] : memref<4x326xbf16, #tpu.memory_space<vmem>>, vector<4x16xbf16>
      tpu.vector_store %arg6[%c0_53, %c55], %85 {strides = array<i32>} : memref<4x326xbf16, #tpu.memory_space<vmem>>, vector<4x16xbf16>,
      %c0_54 = arith.constant 0 : index
      %c0_55 = arith.constant 0 : index
      %c48_56 = arith.constant 48 : index
      %87 = vector.load %arg2[%c0_54, %c0_55, %c48_56] : memref<1x4x256xf32, #tpu.memory_space<vmem>>, vector<1x4x16xf32>
      %88 = vector.shape_cast %87 : vector<1x4x16xf32> to vector<4x16xf32>
      %89 = arith.truncf %88 : vector<4x16xf32> to vector<4x16xbf16>
      %c0_57 = arith.constant 0 : index
      %c73 = arith.constant 73 : index
      %90 = vector.load %arg6[%c0_57, %c73] : memref<4x326xbf16, #tpu.memory_space<vmem>>, vector<4x16xbf16>
      tpu.vector_store %arg6[%c0_57, %c73], %89 {strides = array<i32>} : memref<4x326xbf16, #tpu.memory_space<vmem>>, vector<4x16xbf16>,
      %c0_58 = arith.constant 0 : index
      %c0_59 = arith.constant 0 : index
      %c64_60 = arith.constant 64 : index
      %91 = vector.load %arg2[%c0_58, %c0_59, %c64_60] : memref<1x4x256xf32, #tpu.memory_space<vmem>>, vector<1x4x16xf32>
      %92 = vector.shape_cast %91 : vector<1x4x16xf32> to vector<4x16xf32>
      %93 = arith.truncf %92 : vector<4x16xf32> to vector<4x16xbf16>
      %c0_61 = arith.constant 0 : index
      %c91 = arith.constant 91 : index
      %94 = vector.load %arg6[%c0_61, %c91] : memref<4x326xbf16, #tpu.memory_space<vmem>>, vector<4x16xbf16>
      tpu.vector_store %arg6[%c0_61, %c91], %93 {strides = array<i32>} : memref<4x326xbf16, #tpu.memory_space<vmem>>, vector<4x16xbf16>,
      %c0_62 = arith.constant 0 : index
      %c0_63 = arith.constant 0 : index
      %c80_64 = arith.constant 80 : index
      %95 = vector.load %arg2[%c0_62, %c0_63, %c80_64] : memref<1x4x256xf32, #tpu.memory_space<vmem>>, vector<1x4x16xf32>
      %96 = vector.shape_cast %95 : vector<1x4x16xf32> to vector<4x16xf32>
      %97 = arith.truncf %96 : vector<4x16xf32> to vector<4x16xbf16>
      %c0_65 = arith.constant 0 : index
      %c109 = arith.constant 109 : index
      %98 = vector.load %arg6[%c0_65, %c109] : memref<4x326xbf16, #tpu.memory_space<vmem>>, vector<4x16xbf16>
      tpu.vector_store %arg6[%c0_65, %c109], %97 {strides = array<i32>} : memref<4x326xbf16, #tpu.memory_space<vmem>>, vector<4x16xbf16>,
      %c0_66 = arith.constant 0 : index
      %c0_67 = arith.constant 0 : index
      %c96_68 = arith.constant 96 : index
      %99 = vector.load %arg2[%c0_66, %c0_67, %c96_68] : memref<1x4x256xf32, #tpu.memory_space<vmem>>, vector<1x4x16xf32>
      %100 = vector.shape_cast %99 : vector<1x4x16xf32> to vector<4x16xf32>
      %101 = arith.truncf %100 : vector<4x16xf32> to vector<4x16xbf16>
      %c0_69 = arith.constant 0 : index
      %c127 = arith.constant 127 : index
      %102 = vector.load %arg6[%c0_69, %c127] : memref<4x326xbf16, #tpu.memory_space<vmem>>, vector<4x16xbf16>
      tpu.vector_store %arg6[%c0_69, %c127], %101 {strides = array<i32>} : memref<4x326xbf16, #tpu.memory_space<vmem>>, vector<4x16xbf16>,
      %c0_70 = arith.constant 0 : index
      %c0_71 = arith.constant 0 : index
      %c112_72 = arith.constant 112 : index
      %103 = vector.load %arg2[%c0_70, %c0_71, %c112_72] : memref<1x4x256xf32, #tpu.memory_space<vmem>>, vector<1x4x16xf32>
      %104 = vector.shape_cast %103 : vector<1x4x16xf32> to vector<4x16xf32>
      %105 = arith.truncf %104 : vector<4x16xf32> to vector<4x16xbf16>
      %c0_73 = arith.constant 0 : index
      %c145 = arith.constant 145 : index
      %106 = vector.load %arg6[%c0_73, %c145] : memref<4x326xbf16, #tpu.memory_space<vmem>>, vector<4x16xbf16>
      tpu.vector_store %arg6[%c0_73, %c145], %105 {strides = array<i32>} : memref<4x326xbf16, #tpu.memory_space<vmem>>, vector<4x16xbf16>,
      %c0_74 = arith.constant 0 : index
      %c0_75 = arith.constant 0 : index
      %c128_76 = arith.constant 128 : index
      %107 = vector.load %arg2[%c0_74, %c0_75, %c128_76] : memref<1x4x256xf32, #tpu.memory_space<vmem>>, vector<1x4x16xf32>
      %108 = vector.shape_cast %107 : vector<1x4x16xf32> to vector<4x16xf32>
      %109 = arith.truncf %108 : vector<4x16xf32> to vector<4x16xbf16>
      %c0_77 = arith.constant 0 : index
      %c163 = arith.constant 163 : index
      %110 = vector.load %arg6[%c0_77, %c163] : memref<4x326xbf16, #tpu.memory_space<vmem>>, vector<4x16xbf16>
      tpu.vector_store %arg6[%c0_77, %c163], %109 {strides = array<i32>} : memref<4x326xbf16, #tpu.memory_space<vmem>>, vector<4x16xbf16>,
      %c0_78 = arith.constant 0 : index
      %c0_79 = arith.constant 0 : index
      %c144_80 = arith.constant 144 : index
      %111 = vector.load %arg2[%c0_78, %c0_79, %c144_80] : memref<1x4x256xf32, #tpu.memory_space<vmem>>, vector<1x4x16xf32>
      %112 = vector.shape_cast %111 : vector<1x4x16xf32> to vector<4x16xf32>
      %113 = arith.truncf %112 : vector<4x16xf32> to vector<4x16xbf16>
      %c0_81 = arith.constant 0 : index
      %c181 = arith.constant 181 : index
      %114 = vector.load %arg6[%c0_81, %c181] : memref<4x326xbf16, #tpu.memory_space<vmem>>, vector<4x16xbf16>
      tpu.vector_store %arg6[%c0_81, %c181], %113 {strides = array<i32>} : memref<4x326xbf16, #tpu.memory_space<vmem>>, vector<4x16xbf16>,
      %c0_82 = arith.constant 0 : index
      %c0_83 = arith.constant 0 : index
      %c160_84 = arith.constant 160 : index
      %115 = vector.load %arg2[%c0_82, %c0_83, %c160_84] : memref<1x4x256xf32, #tpu.memory_space<vmem>>, vector<1x4x16xf32>
      %116 = vector.shape_cast %115 : vector<1x4x16xf32> to vector<4x16xf32>
      %117 = arith.truncf %116 : vector<4x16xf32> to vector<4x16xbf16>
      %c0_85 = arith.constant 0 : index
      %c199 = arith.constant 199 : index
      %118 = vector.load %arg6[%c0_85, %c199] : memref<4x326xbf16, #tpu.memory_space<vmem>>, vector<4x16xbf16>
      tpu.vector_store %arg6[%c0_85, %c199], %117 {strides = array<i32>} : memref<4x326xbf16, #tpu.memory_space<vmem>>, vector<4x16xbf16>,
      %c0_86 = arith.constant 0 : index
      %c0_87 = arith.constant 0 : index
      %c176_88 = arith.constant 176 : index
      %119 = vector.load %arg2[%c0_86, %c0_87, %c176_88] : memref<1x4x256xf32, #tpu.memory_space<vmem>>, vector<1x4x16xf32>
      %120 = vector.shape_cast %119 : vector<1x4x16xf32> to vector<4x16xf32>
      %121 = arith.truncf %120 : vector<4x16xf32> to vector<4x16xbf16>
      %c0_89 = arith.constant 0 : index
      %c217 = arith.constant 217 : index
      %122 = vector.load %arg6[%c0_89, %c217] : memref<4x326xbf16, #tpu.memory_space<vmem>>, vector<4x16xbf16>
      tpu.vector_store %arg6[%c0_89, %c217], %121 {strides = array<i32>} : memref<4x326xbf16, #tpu.memory_space<vmem>>, vector<4x16xbf16>,
      %c0_90 = arith.constant 0 : index
      %c0_91 = arith.constant 0 : index
      %c192_92 = arith.constant 192 : index
      %123 = vector.load %arg2[%c0_90, %c0_91, %c192_92] : memref<1x4x256xf32, #tpu.memory_space<vmem>>, vector<1x4x16xf32>
      %124 = vector.shape_cast %123 : vector<1x4x16xf32> to vector<4x16xf32>
      %125 = arith.truncf %124 : vector<4x16xf32> to vector<4x16xbf16>
      %c0_93 = arith.constant 0 : index
      %c235 = arith.constant 235 : index
      %126 = vector.load %arg6[%c0_93, %c235] : memref<4x326xbf16, #tpu.memory_space<vmem>>, vector<4x16xbf16>
      tpu.vector_store %arg6[%c0_93, %c235], %125 {strides = array<i32>} : memref<4x326xbf16, #tpu.memory_space<vmem>>, vector<4x16xbf16>,
      %c0_94 = arith.constant 0 : index
      %c0_95 = arith.constant 0 : index
      %c208_96 = arith.constant 208 : index
      %127 = vector.load %arg2[%c0_94, %c0_95, %c208_96] : memref<1x4x256xf32, #tpu.memory_space<vmem>>, vector<1x4x16xf32>
      %128 = vector.shape_cast %127 : vector<1x4x16xf32> to vector<4x16xf32>
      %129 = arith.truncf %128 : vector<4x16xf32> to vector<4x16xbf16>
      %c0_97 = arith.constant 0 : index
      %c253 = arith.constant 253 : index
      %130 = vector.load %arg6[%c0_97, %c253] : memref<4x326xbf16, #tpu.memory_space<vmem>>, vector<4x16xbf16>
      tpu.vector_store %arg6[%c0_97, %c253], %129 {strides = array<i32>} : memref<4x326xbf16, #tpu.memory_space<vmem>>, vector<4x16xbf16>,
      %c0_98 = arith.constant 0 : index
      %c0_99 = arith.constant 0 : index
      %c224_100 = arith.constant 224 : index
      %131 = vector.load %arg2[%c0_98, %c0_99, %c224_100] : memref<1x4x256xf32, #tpu.memory_space<vmem>>, vector<1x4x16xf32>
      %132 = vector.shape_cast %131 : vector<1x4x16xf32> to vector<4x16xf32>
      %133 = arith.truncf %132 : vector<4x16xf32> to vector<4x16xbf16>
      %c0_101 = arith.constant 0 : index
      %c271 = arith.constant 271 : index
      %134 = vector.load %arg6[%c0_101, %c271] : memref<4x326xbf16, #tpu.memory_space<vmem>>, vector<4x16xbf16>
      tpu.vector_store %arg6[%c0_101, %c271], %133 {strides = array<i32>} : memref<4x326xbf16, #tpu.memory_space<vmem>>, vector<4x16xbf16>,
      %c0_102 = arith.constant 0 : index
      %c0_103 = arith.constant 0 : index
      %c240_104 = arith.constant 240 : index
      %135 = vector.load %arg2[%c0_102, %c0_103, %c240_104] : memref<1x4x256xf32, #tpu.memory_space<vmem>>, vector<1x4x16xf32>
      %136 = vector.shape_cast %135 : vector<1x4x16xf32> to vector<4x16xf32>
      %137 = arith.truncf %136 : vector<4x16xf32> to vector<4x16xbf16>
      %c0_105 = arith.constant 0 : index
      %c289 = arith.constant 289 : index
      %138 = vector.load %arg6[%c0_105, %c289] : memref<4x326xbf16, #tpu.memory_space<vmem>>, vector<4x16xbf16>
      tpu.vector_store %arg6[%c0_105, %c289], %137 {strides = array<i32>} : memref<4x326xbf16, #tpu.memory_space<vmem>>, vector<4x16xbf16>,
      %c0_106 = arith.constant 0 : index
      %c0_107 = arith.constant 0 : index
      %139 = vector.load %arg6[%c0_106, %c0_107] : memref<4x326xbf16, #tpu.memory_space<vmem>>, vector<4x288xbf16>
      %c0_108 = arith.constant 0 : index
      %c0_109 = arith.constant 0 : index
      %140 = vector.load %arg7[%c0_108, %c0_109] : memref<36x288xbf16, #tpu.memory_space<vmem>>, vector<4x288xbf16>
      tpu.vector_store %arg7[%c0_108, %c0_109], %139 {strides = array<i32>} : memref<36x288xbf16, #tpu.memory_space<vmem>>, vector<4x288xbf16>,
      %c0_110 = arith.constant 0 : index
      %c1 = arith.constant 1 : index
      %141 = vector.load %arg6[%c0_110, %c1] : memref<4x326xbf16, #tpu.memory_space<vmem>>, vector<4x288xbf16>
      %c4 = arith.constant 4 : index
      %c0_111 = arith.constant 0 : index
      %142 = vector.load %arg7[%c4, %c0_111] : memref<36x288xbf16, #tpu.memory_space<vmem>>, vector<4x288xbf16>
      tpu.vector_store %arg7[%c4, %c0_111], %141 {strides = array<i32>} : memref<36x288xbf16, #tpu.memory_space<vmem>>, vector<4x288xbf16>,
      %c0_112 = arith.constant 0 : index
      %c2 = arith.constant 2 : index
      %143 = vector.load %arg6[%c0_112, %c2] : memref<4x326xbf16, #tpu.memory_space<vmem>>, vector<4x288xbf16>
      %c8 = arith.constant 8 : index
      %c0_113 = arith.constant 0 : index
      %144 = vector.load %arg7[%c8, %c0_113] : memref<36x288xbf16, #tpu.memory_space<vmem>>, vector<4x288xbf16>
      tpu.vector_store %arg7[%c8, %c0_113], %143 {strides = array<i32>} : memref<36x288xbf16, #tpu.memory_space<vmem>>, vector<4x288xbf16>,
      %c0_114 = arith.constant 0 : index
      %c18 = arith.constant 18 : index
      %145 = vector.load %arg6[%c0_114, %c18] : memref<4x326xbf16, #tpu.memory_space<vmem>>, vector<4x288xbf16>
      %c12 = arith.constant 12 : index
      %c0_115 = arith.constant 0 : index
      %146 = vector.load %arg7[%c12, %c0_115] : memref<36x288xbf16, #tpu.memory_space<vmem>>, vector<4x288xbf16>
      tpu.vector_store %arg7[%c12, %c0_115], %145 {strides = array<i32>} : memref<36x288xbf16, #tpu.memory_space<vmem>>, vector<4x288xbf16>,
      %c0_116 = arith.constant 0 : index
      %c19_117 = arith.constant 19 : index
      %147 = vector.load %arg6[%c0_116, %c19_117] : memref<4x326xbf16, #tpu.memory_space<vmem>>, vector<4x288xbf16>
      %c16_118 = arith.constant 16 : index
      %c0_119 = arith.constant 0 : index
      %148 = vector.load %arg7[%c16_118, %c0_119] : memref<36x288xbf16, #tpu.memory_space<vmem>>, vector<4x288xbf16>
      tpu.vector_store %arg7[%c16_118, %c0_119], %147 {strides = array<i32>} : memref<36x288xbf16, #tpu.memory_space<vmem>>, vector<4x288xbf16>,
      %c0_120 = arith.constant 0 : index
      %c20 = arith.constant 20 : index
      %149 = vector.load %arg6[%c0_120, %c20] : memref<4x326xbf16, #tpu.memory_space<vmem>>, vector<4x288xbf16>
      %c20_121 = arith.constant 20 : index
      %c0_122 = arith.constant 0 : index
      %150 = vector.load %arg7[%c20_121, %c0_122] : memref<36x288xbf16, #tpu.memory_space<vmem>>, vector<4x288xbf16>
      tpu.vector_store %arg7[%c20_121, %c0_122], %149 {strides = array<i32>} : memref<36x288xbf16, #tpu.memory_space<vmem>>, vector<4x288xbf16>,
      %c0_123 = arith.constant 0 : index
      %c36 = arith.constant 36 : index
      %151 = vector.load %arg6[%c0_123, %c36] : memref<4x326xbf16, #tpu.memory_space<vmem>>, vector<4x288xbf16>
      %c24 = arith.constant 24 : index
      %c0_124 = arith.constant 0 : index
      %152 = vector.load %arg7[%c24, %c0_124] : memref<36x288xbf16, #tpu.memory_space<vmem>>, vector<4x288xbf16>
      tpu.vector_store %arg7[%c24, %c0_124], %151 {strides = array<i32>} : memref<36x288xbf16, #tpu.memory_space<vmem>>, vector<4x288xbf16>,
      %c0_125 = arith.constant 0 : index
      %c37_126 = arith.constant 37 : index
      %153 = vector.load %arg6[%c0_125, %c37_126] : memref<4x326xbf16, #tpu.memory_space<vmem>>, vector<4x288xbf16>
      %c28 = arith.constant 28 : index
      %c0_127 = arith.constant 0 : index
      %154 = vector.load %arg7[%c28, %c0_127] : memref<36x288xbf16, #tpu.memory_space<vmem>>, vector<4x288xbf16>
      tpu.vector_store %arg7[%c28, %c0_127], %153 {strides = array<i32>} : memref<36x288xbf16, #tpu.memory_space<vmem>>, vector<4x288xbf16>,
      %c0_128 = arith.constant 0 : index
      %c38 = arith.constant 38 : index
      %155 = vector.load %arg6[%c0_128, %c38] : memref<4x326xbf16, #tpu.memory_space<vmem>>, vector<4x288xbf16>
      %c32_129 = arith.constant 32 : index
      %c0_130 = arith.constant 0 : index
      %156 = vector.load %arg7[%c32_129, %c0_130] : memref<36x288xbf16, #tpu.memory_space<vmem>>, vector<4x288xbf16>
      tpu.vector_store %arg7[%c32_129, %c0_130], %155 {strides = array<i32>} : memref<36x288xbf16, #tpu.memory_space<vmem>>, vector<4x288xbf16>,
    } else {
    }
    %c0 = arith.constant 0 : index
    %c0_1 = arith.constant 0 : index
    %3 = vector.load %arg3[%c0, %c0_1] : memref<8x36xbf16, #tpu.memory_space<vmem>>, vector<8x36xbf16>
    %c0_2 = arith.constant 0 : index
    %c0_3 = arith.constant 0 : index
    %4 = vector.load %arg7[%c0_2, %c0_3] : memref<36x288xbf16, #tpu.memory_space<vmem>>, vector<36x288xbf16>
    %cst = arith.constant dense<0.000000e+00> : vector<8x288xf32>
    %5 = tpu.matmul %3, %4, %cst {dimension_numbers = #tpu.dot_dimension_numbers<[1], [0], [0], [1], [0, 0, 1, 1], [], []>} : vector<8x36xbf16>, vector<36x288xbf16>, vector<8x288xf32> -> vector<8x288xf32>
    %c0_4 = arith.constant 0 : index
    %c0_5 = arith.constant 0 : index
    %6 = vector.load %arg4[%c0_4, %c0_5] : memref<8x1xf32, #tpu.memory_space<vmem>>, vector<8x1xf32>
    %7 = vector.broadcast %6 : vector<8x1xf32> to vector<8x288xf32>
    %8 = arith.addf %5, %7 : vector<8x288xf32>
    %9 = vector.extract_strided_slice %8 {offsets = [0, 0], sizes = [8, 16], strides = [1, 1]} : vector<8x288xf32> to vector<8x16xf32>
    %c0_6 = arith.constant 0 : index
    %c0_7 = arith.constant 0 : index
    %c0_8 = arith.constant 0 : index
    %10 = vector.load %arg5[%c0_6, %c0_7, %c0_8] : memref<1x8x256xf32, #tpu.memory_space<vmem>>, vector<1x8x16xf32>
    %11 = vector.shape_cast %10 : vector<1x8x16xf32> to vector<8x16xf32>
    %12 = vector.shape_cast %9 : vector<8x16xf32> to vector<1x8x16xf32>
    tpu.vector_store %arg5[%c0_6, %c0_7, %c0_8], %12 {strides = array<i32>} : memref<1x8x256xf32, #tpu.memory_space<vmem>>, vector<1x8x16xf32>,
    %13 = vector.extract_strided_slice %8 {offsets = [0, 18], sizes = [8, 16], strides = [1, 1]} : vector<8x288xf32> to vector<8x16xf32>
    %c0_9 = arith.constant 0 : index
    %c0_10 = arith.constant 0 : index
    %c16 = arith.constant 16 : index
    %14 = vector.load %arg5[%c0_9, %c0_10, %c16] : memref<1x8x256xf32, #tpu.memory_space<vmem>>, vector<1x8x16xf32>
    %15 = vector.shape_cast %14 : vector<1x8x16xf32> to vector<8x16xf32>
    %16 = vector.shape_cast %13 : vector<8x16xf32> to vector<1x8x16xf32>
    tpu.vector_store %arg5[%c0_9, %c0_10, %c16], %16 {strides = array<i32>} : memref<1x8x256xf32, #tpu.memory_space<vmem>>, vector<1x8x16xf32>,
    %17 = vector.extract_strided_slice %8 {offsets = [0, 36], sizes = [8, 16], strides = [1, 1]} : vector<8x288xf32> to vector<8x16xf32>
    %c0_11 = arith.constant 0 : index
    %c0_12 = arith.constant 0 : index
    %c32 = arith.constant 32 : index
    %18 = vector.load %arg5[%c0_11, %c0_12, %c32] : memref<1x8x256xf32, #tpu.memory_space<vmem>>, vector<1x8x16xf32>
    %19 = vector.shape_cast %18 : vector<1x8x16xf32> to vector<8x16xf32>
    %20 = vector.shape_cast %17 : vector<8x16xf32> to vector<1x8x16xf32>
    tpu.vector_store %arg5[%c0_11, %c0_12, %c32], %20 {strides = array<i32>} : memref<1x8x256xf32, #tpu.memory_space<vmem>>, vector<1x8x16xf32>,
    %21 = vector.extract_strided_slice %8 {offsets = [0, 54], sizes = [8, 16], strides = [1, 1]} : vector<8x288xf32> to vector<8x16xf32>
    %c0_13 = arith.constant 0 : index
    %c0_14 = arith.constant 0 : index
    %c48 = arith.constant 48 : index
    %22 = vector.load %arg5[%c0_13, %c0_14, %c48] : memref<1x8x256xf32, #tpu.memory_space<vmem>>, vector<1x8x16xf32>
    %23 = vector.shape_cast %22 : vector<1x8x16xf32> to vector<8x16xf32>
    %24 = vector.shape_cast %21 : vector<8x16xf32> to vector<1x8x16xf32>
    tpu.vector_store %arg5[%c0_13, %c0_14, %c48], %24 {strides = array<i32>} : memref<1x8x256xf32, #tpu.memory_space<vmem>>, vector<1x8x16xf32>,
    %25 = vector.extract_strided_slice %8 {offsets = [0, 72], sizes = [8, 16], strides = [1, 1]} : vector<8x288xf32> to vector<8x16xf32>
    %c0_15 = arith.constant 0 : index
    %c0_16 = arith.constant 0 : index
    %c64 = arith.constant 64 : index
    %26 = vector.load %arg5[%c0_15, %c0_16, %c64] : memref<1x8x256xf32, #tpu.memory_space<vmem>>, vector<1x8x16xf32>
    %27 = vector.shape_cast %26 : vector<1x8x16xf32> to vector<8x16xf32>
    %28 = vector.shape_cast %25 : vector<8x16xf32> to vector<1x8x16xf32>
    tpu.vector_store %arg5[%c0_15, %c0_16, %c64], %28 {strides = array<i32>} : memref<1x8x256xf32, #tpu.memory_space<vmem>>, vector<1x8x16xf32>,
    %29 = vector.extract_strided_slice %8 {offsets = [0, 90], sizes = [8, 16], strides = [1, 1]} : vector<8x288xf32> to vector<8x16xf32>
    %c0_17 = arith.constant 0 : index
    %c0_18 = arith.constant 0 : index
    %c80 = arith.constant 80 : index
    %30 = vector.load %arg5[%c0_17, %c0_18, %c80] : memref<1x8x256xf32, #tpu.memory_space<vmem>>, vector<1x8x16xf32>
    %31 = vector.shape_cast %30 : vector<1x8x16xf32> to vector<8x16xf32>
    %32 = vector.shape_cast %29 : vector<8x16xf32> to vector<1x8x16xf32>
    tpu.vector_store %arg5[%c0_17, %c0_18, %c80], %32 {strides = array<i32>} : memref<1x8x256xf32, #tpu.memory_space<vmem>>, vector<1x8x16xf32>,
    %33 = vector.extract_strided_slice %8 {offsets = [0, 108], sizes = [8, 16], strides = [1, 1]} : vector<8x288xf32> to vector<8x16xf32>
    %c0_19 = arith.constant 0 : index
    %c0_20 = arith.constant 0 : index
    %c96 = arith.constant 96 : index
    %34 = vector.load %arg5[%c0_19, %c0_20, %c96] : memref<1x8x256xf32, #tpu.memory_space<vmem>>, vector<1x8x16xf32>
    %35 = vector.shape_cast %34 : vector<1x8x16xf32> to vector<8x16xf32>
    %36 = vector.shape_cast %33 : vector<8x16xf32> to vector<1x8x16xf32>
    tpu.vector_store %arg5[%c0_19, %c0_20, %c96], %36 {strides = array<i32>} : memref<1x8x256xf32, #tpu.memory_space<vmem>>, vector<1x8x16xf32>,
    %37 = vector.extract_strided_slice %8 {offsets = [0, 126], sizes = [8, 16], strides = [1, 1]} : vector<8x288xf32> to vector<8x16xf32>
    %c0_21 = arith.constant 0 : index
    %c0_22 = arith.constant 0 : index
    %c112 = arith.constant 112 : index
    %38 = vector.load %arg5[%c0_21, %c0_22, %c112] : memref<1x8x256xf32, #tpu.memory_space<vmem>>, vector<1x8x16xf32>
    %39 = vector.shape_cast %38 : vector<1x8x16xf32> to vector<8x16xf32>
    %40 = vector.shape_cast %37 : vector<8x16xf32> to vector<1x8x16xf32>
    tpu.vector_store %arg5[%c0_21, %c0_22, %c112], %40 {strides = array<i32>} : memref<1x8x256xf32, #tpu.memory_space<vmem>>, vector<1x8x16xf32>,
    %41 = vector.extract_strided_slice %8 {offsets = [0, 144], sizes = [8, 16], strides = [1, 1]} : vector<8x288xf32> to vector<8x16xf32>
    %c0_23 = arith.constant 0 : index
    %c0_24 = arith.constant 0 : index
    %c128 = arith.constant 128 : index
    %42 = vector.load %arg5[%c0_23, %c0_24, %c128] : memref<1x8x256xf32, #tpu.memory_space<vmem>>, vector<1x8x16xf32>
    %43 = vector.shape_cast %42 : vector<1x8x16xf32> to vector<8x16xf32>
    %44 = vector.shape_cast %41 : vector<8x16xf32> to vector<1x8x16xf32>
    tpu.vector_store %arg5[%c0_23, %c0_24, %c128], %44 {strides = array<i32>} : memref<1x8x256xf32, #tpu.memory_space<vmem>>, vector<1x8x16xf32>,
    %45 = vector.extract_strided_slice %8 {offsets = [0, 162], sizes = [8, 16], strides = [1, 1]} : vector<8x288xf32> to vector<8x16xf32>
    %c0_25 = arith.constant 0 : index
    %c0_26 = arith.constant 0 : index
    %c144 = arith.constant 144 : index
    %46 = vector.load %arg5[%c0_25, %c0_26, %c144] : memref<1x8x256xf32, #tpu.memory_space<vmem>>, vector<1x8x16xf32>
    %47 = vector.shape_cast %46 : vector<1x8x16xf32> to vector<8x16xf32>
    %48 = vector.shape_cast %45 : vector<8x16xf32> to vector<1x8x16xf32>
    tpu.vector_store %arg5[%c0_25, %c0_26, %c144], %48 {strides = array<i32>} : memref<1x8x256xf32, #tpu.memory_space<vmem>>, vector<1x8x16xf32>,
    %49 = vector.extract_strided_slice %8 {offsets = [0, 180], sizes = [8, 16], strides = [1, 1]} : vector<8x288xf32> to vector<8x16xf32>
    %c0_27 = arith.constant 0 : index
    %c0_28 = arith.constant 0 : index
    %c160 = arith.constant 160 : index
    %50 = vector.load %arg5[%c0_27, %c0_28, %c160] : memref<1x8x256xf32, #tpu.memory_space<vmem>>, vector<1x8x16xf32>
    %51 = vector.shape_cast %50 : vector<1x8x16xf32> to vector<8x16xf32>
    %52 = vector.shape_cast %49 : vector<8x16xf32> to vector<1x8x16xf32>
    tpu.vector_store %arg5[%c0_27, %c0_28, %c160], %52 {strides = array<i32>} : memref<1x8x256xf32, #tpu.memory_space<vmem>>, vector<1x8x16xf32>,
    %53 = vector.extract_strided_slice %8 {offsets = [0, 198], sizes = [8, 16], strides = [1, 1]} : vector<8x288xf32> to vector<8x16xf32>
    %c0_29 = arith.constant 0 : index
    %c0_30 = arith.constant 0 : index
    %c176 = arith.constant 176 : index
    %54 = vector.load %arg5[%c0_29, %c0_30, %c176] : memref<1x8x256xf32, #tpu.memory_space<vmem>>, vector<1x8x16xf32>
    %55 = vector.shape_cast %54 : vector<1x8x16xf32> to vector<8x16xf32>
    %56 = vector.shape_cast %53 : vector<8x16xf32> to vector<1x8x16xf32>
    tpu.vector_store %arg5[%c0_29, %c0_30, %c176], %56 {strides = array<i32>} : memref<1x8x256xf32, #tpu.memory_space<vmem>>, vector<1x8x16xf32>,
    %57 = vector.extract_strided_slice %8 {offsets = [0, 216], sizes = [8, 16], strides = [1, 1]} : vector<8x288xf32> to vector<8x16xf32>
    %c0_31 = arith.constant 0 : index
    %c0_32 = arith.constant 0 : index
    %c192 = arith.constant 192 : index
    %58 = vector.load %arg5[%c0_31, %c0_32, %c192] : memref<1x8x256xf32, #tpu.memory_space<vmem>>, vector<1x8x16xf32>
    %59 = vector.shape_cast %58 : vector<1x8x16xf32> to vector<8x16xf32>
    %60 = vector.shape_cast %57 : vector<8x16xf32> to vector<1x8x16xf32>
    tpu.vector_store %arg5[%c0_31, %c0_32, %c192], %60 {strides = array<i32>} : memref<1x8x256xf32, #tpu.memory_space<vmem>>, vector<1x8x16xf32>,
    %61 = vector.extract_strided_slice %8 {offsets = [0, 234], sizes = [8, 16], strides = [1, 1]} : vector<8x288xf32> to vector<8x16xf32>
    %c0_33 = arith.constant 0 : index
    %c0_34 = arith.constant 0 : index
    %c208 = arith.constant 208 : index
    %62 = vector.load %arg5[%c0_33, %c0_34, %c208] : memref<1x8x256xf32, #tpu.memory_space<vmem>>, vector<1x8x16xf32>
    %63 = vector.shape_cast %62 : vector<1x8x16xf32> to vector<8x16xf32>
    %64 = vector.shape_cast %61 : vector<8x16xf32> to vector<1x8x16xf32>
    tpu.vector_store %arg5[%c0_33, %c0_34, %c208], %64 {strides = array<i32>} : memref<1x8x256xf32, #tpu.memory_space<vmem>>, vector<1x8x16xf32>,
    %65 = vector.extract_strided_slice %8 {offsets = [0, 252], sizes = [8, 16], strides = [1, 1]} : vector<8x288xf32> to vector<8x16xf32>
    %c0_35 = arith.constant 0 : index
    %c0_36 = arith.constant 0 : index
    %c224 = arith.constant 224 : index
    %66 = vector.load %arg5[%c0_35, %c0_36, %c224] : memref<1x8x256xf32, #tpu.memory_space<vmem>>, vector<1x8x16xf32>
    %67 = vector.shape_cast %66 : vector<1x8x16xf32> to vector<8x16xf32>
    %68 = vector.shape_cast %65 : vector<8x16xf32> to vector<1x8x16xf32>
    tpu.vector_store %arg5[%c0_35, %c0_36, %c224], %68 {strides = array<i32>} : memref<1x8x256xf32, #tpu.memory_space<vmem>>, vector<1x8x16xf32>,
    %69 = vector.extract_strided_slice %8 {offsets = [0, 270], sizes = [8, 16], strides = [1, 1]} : vector<8x288xf32> to vector<8x16xf32>
    %c0_37 = arith.constant 0 : index
    %c0_38 = arith.constant 0 : index
    %c240 = arith.constant 240 : index
    %70 = vector.load %arg5[%c0_37, %c0_38, %c240] : memref<1x8x256xf32, #tpu.memory_space<vmem>>, vector<1x8x16xf32>
    %71 = vector.shape_cast %70 : vector<1x8x16xf32> to vector<8x16xf32>
    %72 = vector.shape_cast %69 : vector<8x16xf32> to vector<1x8x16xf32>
    tpu.vector_store %arg5[%c0_37, %c0_38, %c240], %72 {strides = array<i32>} : memref<1x8x256xf32, #tpu.memory_space<vmem>>, vector<1x8x16xf32>,
    return
  }
  func.func @transform_0(%arg0: i32, %arg1: i32) -> (i32, i32, i32) {
    %c0_i32 = arith.constant 0 : i32
    %c0_i32_0 = arith.constant 0 : i32
    %c0_i32_1 = arith.constant 0 : i32
    return %arg0, %c0_i32, %c0_i32_0 : i32, i32, i32
  }
  func.func @transform_1(%arg0: i32, %arg1: i32) -> (i32, i32) {
    %c0_i32 = arith.constant 0 : i32
    %c0_i32_0 = arith.constant 0 : i32
    return %arg1, %c0_i32 : i32, i32
  }
  func.func @transform_2(%arg0: i32, %arg1: i32) -> (i32, i32) {
    %c0_i32 = arith.constant 0 : i32
    %c0_i32_0 = arith.constant 0 : i32
    return %arg1, %c0_i32 : i32, i32
  }
  func.func @transform_3(%arg0: i32, %arg1: i32) -> (i32, i32, i32) {
    %c0_i32 = arith.constant 0 : i32
    %c0_i32_0 = arith.constant 0 : i32
    return %arg0, %arg1, %c0_i32 : i32, i32, i32
  }
}

</mosaic_0001>

<llo_original>
// kernel: tpu_custom_call.1
$region0: #{tpu_custom_call.1}
  #allocation0 [shape = 'u32[]', space=smem, size = 0x4, offset = 0x4, fixed_abs, tag = 'smem constant byte address 0x4 - core index']
  #allocation1 [shape = 'u32[144,128]{1,0:T(1,128)}', space=vmem, size = 0x12000, scoped, tag = 'internal scratch']
  #allocation2 [shape = 'bf16[4,326]{1,0:T(4,128)(2,1)}', space=vmem, size = 0xc00, scoped, tag = 'scratch operand']
  #allocation3 [shape = 'bf16[36,288]{1,0:T(8,128)(2,1)}', space=vmem, size = 0x7800, scoped, tag = 'scratch operand']
  %s0 = inlined_call_operand.hbm [shape: f32[2,4,256], index: 0, kind: input, shape index: {}]
  %s1 = inlined_call_operand.vmem [shape: bf16[8,36], index: 1, kind: input, shape index: {}]
  %s2 = inlined_call_operand.vmem [shape: f32[8,1], index: 2, kind: input, shape index: {}]
  %s3 = inlined_call_operand.hbm [shape: f32[2,8,256], index: 3, kind: output, shape index: {}]
  %s4 = sld [smem:[#allocation0]]
  $region53: #{tpu_custom_call.1} parent=0
    _
  %s6 = ssub.s32 1, %s4
  %s7 = scalar_select 0, %s6, %s4
  $region1: #{tpu_custom_call.1} parent=0
    #allocation4 [shape = 'u8[8192]{0}', space=vmem, size = 0x2000, scoped, tag = 'input window, operand 0']
    #allocation5 [shape = 's32[2]{0}', space=sflag, size = 0x8, scoped, tag = 'scoped memory for tpu_custom_call.1']
    #allocation6 [shape = 's32[2]{0}', space=sflag, size = 0x8, scoped, tag = 'scoped memory for tpu_custom_call.1']
    #allocation7 [shape = 'u8[16384]{0}', space=vmem, size = 0x4000, scoped, tag = 'output window, operand 0']
    %8 = vsyncpa [#allocation5], 0
    %s9 = scalar_lea.sflag [#allocation5], 1
    %10 = vsyncpa %s9, 0
    %11 = vsyncpa [#allocation6], 0
    %s12 = scalar_lea.sflag [#allocation6], 1
    %13 = vsyncpa %s12, 0
    loop: start=0, step=1, limit=4
    $region2: #{tpu_custom_call.1} parent=1 // loop_pre_header
      _
    $region3: #{tpu_custom_call.1} parent=1 // loop_header
      %s15 = sphi 0, %s19
      %p16 = scmp.ge.s32.totalorder %s15, 4
      %s22 = sphi 0, %s34
      %s23 = sphi 0, %s30
      %s24 = sphi 0, %s22
      %s25 = sphi 0, %s23
      %s26 = sphi 0, %s24
      %s27 = sphi 0, %s25
      %s37 = sphi 0, %s39
      %s40 = sphi 0, %s37
      %s41 = sphi 0, %s40
      %s57 = sphi 0, %s41
      %s63 = sphi 0, %s65
      %s66 = sphi 0, %s63
      %s67 = sphi 0, %s66
      %s83 = sphi 0, %s67
      %s89 = sphi 0, %s91
      %s92 = sphi 0, %s89
      %s93 = sphi 0, %s92
      %s109 = sphi 0, %s93
      %s117 = sphi 0, %s119
      %s120 = sphi 0, %s117
      %s121 = sphi 0, %s120
      %s137 = sphi 0, %s121
    $region4: #{tpu_custom_call.1} parent=1 // loop_header_branch
      %18 = sbr.rel (%p16) target = $region8
    $region5: #{tpu_custom_call.1} parent=1 // loop_body
      %s20 = ssub.s32 %s15, 1
      %s21 = ssub.s32 %s15, 2
      %s28 = sadd.s32 1, %s23
      %p29 = scmp.ge.s32.totalorder %s28, 1
      %s30 = scalar_select %p29, 0, %s28
      %s31 = sadd.s32 1, %s22
      %s32 = scalar_select %p29, %s31, %s22
      %p33 = scmp.ge.s32.totalorder %s32, 2
      %s34 = scalar_select %p33, 0, %s32
      %s35 = ssub.s32 %s22, %s34
      %p36 = scmp.eq.s32.totalorder %s35, 0
      %s38 = sadd.s32 %s37, 1
      %s39 = scalar_select %p36, %s37, %s38
      %p42 = pneg %p36
      %p43 = scmp.eq.s32.totalorder %s15, 1
      %p44 = por %p42, %p43
      %p45 = scmp.ne.s32.totalorder %s37, %s40
      %p46 = scmp.eq.s32.totalorder %s15, 0
      %p47 = por %p45, %p46
      %p48 = scmp.ne.s32.totalorder %s37, %s40
      %p49 = scmp.eq.s32.totalorder %s20, 1
      %p50 = por %p48, %p49
      %p51 = scmp.ne.s32.totalorder %s40, %s41
      %p52 = scmp.eq.s32.totalorder %s20, 0
      %p53 = por %p51, %p52
      %p54 = scmp.ne.s32.totalorder %s40, %s41
      %p55 = scmp.eq.s32.totalorder %s21, 1
      %p56 = por %p54, %p55
      %p58 = scmp.ne.s32.totalorder %s41, %s57
      %p59 = scmp.eq.s32.totalorder %s21, 0
      %p60 = por %p58, %p59
      %s61 = ssub.s32 %s23, %s30
      %p62 = scmp.eq.s32.totalorder %s61, 0
      %s64 = sadd.s32 %s63, 1
      %s65 = scalar_select %p62, %s63, %s64
      %p68 = pneg %p62
      %p69 = scmp.eq.s32.totalorder %s15, 1
      %p70 = por %p68, %p69
      %p71 = scmp.ne.s32.totalorder %s63, %s66
      %p72 = scmp.eq.s32.totalorder %s15, 0
      %p73 = por %p71, %p72
      %p74 = scmp.ne.s32.totalorder %s63, %s66
      %p75 = scmp.eq.s32.totalorder %s20, 1
      %p76 = por %p74, %p75
      %p77 = scmp.ne.s32.totalorder %s66, %s67
      %p78 = scmp.eq.s32.totalorder %s20, 0
      %p79 = por %p77, %p78
      %p80 = scmp.ne.s32.totalorder %s66, %s67
      %p81 = scmp.eq.s32.totalorder %s21, 1
      %p82 = por %p80, %p81
      %p84 = scmp.ne.s32.totalorder %s67, %s83
      %p85 = scmp.eq.s32.totalorder %s21, 0
      %p86 = por %p84, %p85
      %s87 = ssub.s32 %s23, %s30
      %p88 = scmp.eq.s32.totalorder %s87, 0
      %s90 = sadd.s32 %s89, 1
      %s91 = scalar_select %p88, %s89, %s90
      %p94 = pneg %p88
      %p95 = scmp.eq.s32.totalorder %s15, 1
      %p96 = por %p94, %p95
      %p97 = scmp.ne.s32.totalorder %s89, %s92
      %p98 = scmp.eq.s32.totalorder %s15, 0
      %p99 = por %p97, %p98
      %p100 = scmp.ne.s32.totalorder %s89, %s92
      %p101 = scmp.eq.s32.totalorder %s20, 1
      %p102 = por %p100, %p101
      %p103 = scmp.ne.s32.totalorder %s92, %s93
      %p104 = scmp.eq.s32.totalorder %s20, 0
      %p105 = por %p103, %p104
      %p106 = scmp.ne.s32.totalorder %s92, %s93
      %p107 = scmp.eq.s32.totalorder %s21, 1
      %p108 = por %p106, %p107
      %p110 = scmp.ne.s32.totalorder %s93, %s109
      %p111 = scmp.eq.s32.totalorder %s21, 0
      %p112 = por %p110, %p111
      %s113 = ssub.s32 %s22, %s34
      %s114 = ssub.s32 %s23, %s30
      %s115 = sor.u32 %s113, %s114
      %p116 = scmp.eq.s32.totalorder %s115, 0
      %s118 = sadd.s32 %s117, 1
      %s119 = scalar_select %p116, %s117, %s118
      %p122 = pneg %p116
      %p123 = scmp.eq.s32.totalorder %s15, 1
      %p124 = por %p122, %p123
      %p125 = scmp.ne.s32.totalorder %s117, %s120
      %p126 = scmp.eq.s32.totalorder %s15, 0
      %p127 = por %p125, %p126
      %p128 = scmp.ne.s32.totalorder %s117, %s120
      %p129 = scmp.eq.s32.totalorder %s20, 1
      %p130 = por %p128, %p129
      %p131 = scmp.ne.s32.totalorder %s120, %s121
      %p132 = scmp.eq.s32.totalorder %s20, 0
      %p133 = por %p131, %p132
      %p134 = scmp.ne.s32.totalorder %s120, %s121
      %p135 = scmp.eq.s32.totalorder %s21, 1
      %p136 = por %p134, %p135
      %p138 = scmp.ne.s32.totalorder %s121, %s137
      %p139 = scmp.eq.s32.totalorder %s21, 0
      %p140 = por %p138, %p139
      %p141 = scmp.le.s32.totalorder 1, %s15
      %p142 = scmp.lt.s32.totalorder %s15, 3
      %p143 = pnand %p141, %p142
      %p144 = pneg %p143
      // Predicated region
      $region9: #{tpu_custom_call.1} parent=5 // pred_check
        _
      $region10: #{tpu_custom_call.1} parent=5 // pred_check_branch
        %146 = sbr.rel (%p143) target = $region12
      $region11: #{tpu_custom_call.1} parent=5 // pred_region
        %s147 = ssub.s32 %s15, 1
        // Predicated region
        $region13: #{tpu_custom_call.1} parent=11 // pred_check
          %p148 = pneg %p79
        $region14: #{tpu_custom_call.1} parent=11 // pred_check_branch
          %150 = sbr.rel (%p148) target = $region16
        $region15: #{tpu_custom_call.1} parent=11 // pred_region
          %p151 = scmp.lt.s32.totalorder %s25, 0
          %s152 = scalar_select %p151, %s25, 0
          %s153 = smul.addr %s152, 4
          %s154 = scalar_lea.vmem %s1, %s153
        $region16: #{tpu_custom_call.1} parent=11 // pred_fallthru
          _
        // Predicated region
        $region17: #{tpu_custom_call.1} parent=11 // pred_check
          %p155 = pneg %p105
        $region18: #{tpu_custom_call.1} parent=11 // pred_check_branch
          %157 = sbr.rel (%p155) target = $region20
        $region19: #{tpu_custom_call.1} parent=11 // pred_region
          %p158 = scmp.lt.s32.totalorder %s25, 0
          %s159 = scalar_select %p158, %s25, 0
          %s160 = smul.addr %s159, 8
          %s161 = scalar_lea.vmem %s2, %s160
        $region20: #{tpu_custom_call.1} parent=11 // pred_fallthru
          _
      $region12: #{tpu_custom_call.1} parent=5 // pred_fallthru
        _
      %p162 = scmp.lt.s32.totalorder %s15, 2
      // Predicated region
      $region21: #{tpu_custom_call.1} parent=5 // pred_check
        %p163 = pneg %p162
      $region22: #{tpu_custom_call.1} parent=5 // pred_check_branch
        %165 = sbr.rel (%p163) target = $region24
      $region23: #{tpu_custom_call.1} parent=5 // pred_region
        // Predicated region
        $region25: #{tpu_custom_call.1} parent=23 // pred_check
          %p166 = pneg %p47
        $region26: #{tpu_custom_call.1} parent=23 // pred_check_branch
          %168 = sbr.rel (%p166) target = $region28
        $region27: #{tpu_custom_call.1} parent=23 // pred_region
          %s169 = sand.u32 %s37, 1
          %s170 = scalar_lea.sflag [#allocation5], %s169
          %s171 = sand.u32 %s37, 1
          %s172 = smul.addr %s171, 8
          %s173 = scalar_lea.vmem [#allocation4], %s172
          %s175 = ssub.s32 128, 128
          %176 = vsyncadd %s170, %s175
          %s177 = smul.addr %s22, 2
          %s178 = smul.addr %s177, 64
          %s179 = scalar_lea.hbm %s0, %s178
          %s181 = sshll.u32 %s173, 4
          %s182 = int_to_ptr.vmem [resolvable:$true] %s181
          %184 = dma.hbm_to_vmem [thread:$0]  %s179, 128, %s182, %s170
        $region28: #{tpu_custom_call.1} parent=23 // pred_fallthru
          _
      $region24: #{tpu_custom_call.1} parent=5 // pred_fallthru
        _
      %p185 = scmp.le.s32.totalorder 1, %s15
      %p186 = scmp.lt.s32.totalorder %s15, 3
      %p187 = pnand %p185, %p186
      %p188 = pneg %p187
      // Predicated region
      $region29: #{tpu_custom_call.1} parent=5 // pred_check
        _
      $region30: #{tpu_custom_call.1} parent=5 // pred_check_branch
        %190 = sbr.rel (%p187) target = $region32
      $region31: #{tpu_custom_call.1} parent=5 // pred_region
        %s191 = ssub.s32 %s15, 1
        %s192 = sand.u32 %s40, 1
        %s193 = scalar_lea.sflag [#allocation5], %s192
        %s194 = sand.u32 %s40, 1
        %s195 = smul.addr %s194, 8
        %s196 = scalar_lea.vmem [#allocation4], %s195
        // Predicated region
        $region33: #{tpu_custom_call.1} parent=31 // pred_check
          %p197 = pneg %p53
        $region34: #{tpu_custom_call.1} parent=31 // pred_check_branch
          %199 = sbr.rel (%p197) target = $region36
        $region35: #{tpu_custom_call.1} parent=31 // pred_region
          %200 = dma.done %s193, 128
        $region36: #{tpu_custom_call.1} parent=31 // pred_fallthru
          _
        %s201 = sand.u32 %s40, 1
        %s202 = scalar_lea.sflag [#allocation5], %s201
        %s203 = sand.u32 %s40, 1
        %s204 = smul.addr %s203, 8
        %s205 = scalar_lea.vmem [#allocation4], %s204
        %p206 = pneg %p53
        %p207 = pneg %p50
        %p208 = scmp.lt.s32.totalorder %s25, 0
        %s209 = scalar_select %p208, %s25, 0
        %s210 = smul.addr %s209, 4
        %s211 = scalar_lea.vmem %s1, %s210
        %p212 = pneg %p79
        %p213 = pneg %p76
        %p214 = scmp.lt.s32.totalorder %s25, 0
        %s215 = scalar_select %p214, %s25, 0
        %s216 = smul.addr %s215, 8
        %s217 = scalar_lea.vmem %s2, %s216
        %p218 = pneg %p105
        %p219 = pneg %p102
        %p220 = pneg %p133
        %p221 = pneg %p130
        %s222 = sand.u32 %s120, 1
        %s223 = scalar_lea.sflag [#allocation6], %s222
        %s224 = sand.u32 %s120, 1
        %s225 = smul.addr %s224, 16
        %s226 = scalar_lea.vmem [#allocation7], %s225
        %p227 = scmp.lt.s32.totalorder %s25, 0
        %s228 = scalar_select %p227, %s25, 0
        %s229 = smul.addr %s228, 4
        %s230 = scalar_lea.vmem %s1, %s229
        %p231 = scmp.lt.s32.totalorder %s25, 0
        %s232 = scalar_select %p231, %s25, 0
        %s233 = smul.addr %s232, 8
        %s234 = scalar_lea.vmem %s2, %s233
        %p236 = scmp.eq.s32.totalorder %s25, 0
        // Predicated region
        $region37: #{tpu_custom_call.1} parent=31 // pred_check
          %p237 = pneg %p236
        $region38: #{tpu_custom_call.1} parent=31 // pred_check_branch
          %239 = sbr.rel (%p237) target = $region40
        $region39: #{tpu_custom_call.1} parent=31 // pred_region
          %vm240 = vcmask 1041408
          %vm241 = vcmask 1043458
          %vm242 = vmor %vm241, %vm240
          %vm243 = vcmask 570372
          %vm244 = vmor %vm243, %vm242
          %245 = vst.msk [vmem:[#allocation2] sm:$0x3f] %vm244, 0
          %v246 = vld [vmem:[%s196] sm:$0xf]
          %v247 = vpack.c.bf16 %v246, %v246
          %v250 = vunpack.c.l.s4 1983009808
          %v251 = vunpack.c.0.s8 %v250
          %v252 = vlaneseq
          %v253 = vshrl.u32 %v252, 7
          %v254 = vsub.s32 %v251, %v253
          %v255 = vrot.slane %v247, %v254
          %256 = vrot.lane.b32.xlu0 %v255, 19
          %v257 = vpop.permute.xlu0 %256
          %vm259 = vcmask 279704
          %260 = vst.msk [vmem:[#allocation2] sm:$0x3] %vm259, %v257
          %v261 = vld [vmem:[%s196] sm:$0xf]
          %v262 = vpack.c.bf16 %v261, %v261
          %v265 = vunpack.c.l.s4 1983009808
          %v266 = vunpack.c.0.s8 %v265
          %v267 = vlaneseq
          %v268 = vshrl.u32 %v267, 7
          %v269 = vsub.s32 %v266, %v268
          %v270 = vrot.slane %v262, %v269
          %271 = vrot.lane.b32.xlu0 %v270, 21
          %v272 = vpop.permute.xlu0 %271
          %vm274 = vcmask 427304
          %275 = vst.msk [vmem:[#allocation2] sm:$0x3] %vm274, %v272
          %v276 = vld [vmem:[%s196] sm:$0xf]
          %v277 = vpack.c.bf16 %v276, %v276
          %v280 = vunpack.c.l.s4 1983009808
          %v281 = vunpack.c.0.s8 %v280
          %v282 = vlaneseq
          %v283 = vshrl.u32 %v282, 7
          %v284 = vsub.s32 %v281, %v283
          %v285 = vrot.slane %v277, %v284
          %286 = vrot.lane.b32.xlu0 %v285, 23
          %v287 = vpop.permute.xlu0 %286
          %vm289 = vcmask 574904
          %290 = vst.msk [vmem:[#allocation2] sm:$0x3] %vm289, %v287
          %v291 = vld [vmem:[%s196] sm:$0xf]
          %v292 = vpack.c.bf16 %v291, %v291
          %v295 = vunpack.c.l.s4 1983009808
          %v296 = vunpack.c.0.s8 %v295
          %v297 = vlaneseq
          %v298 = vshrl.u32 %v297, 7
          %v299 = vsub.s32 %v296, %v298
          %v300 = vrot.slane %v292, %v299
          %301 = vrot.lane.b32.xlu0 %v300, 25
          %v302 = vpop.permute.xlu0 %301
          %vm304 = vcmask 722504
          %305 = vst.msk [vmem:[#allocation2] sm:$0x3] %vm304, %v302
          %v306 = vld [vmem:[%s196] sm:$0xf]
          %v307 = vpack.c.bf16 %v306, %v306
          %v310 = vunpack.c.l.s4 1983009808
          %v311 = vunpack.c.0.s8 %v310
          %v312 = vlaneseq
          %v313 = vshrl.u32 %v312, 7
          %v314 = vsub.s32 %v311, %v313
          %v315 = vrot.slane %v307, %v314
          %316 = vrot.lane.b32.xlu0 %v315, 27
          %v317 = vpop.permute.xlu0 %316
          %vm319 = vcmask 870104
          %320 = vst.msk [vmem:[#allocation2] sm:$0x3] %vm319, %v317
          %v321 = vld [vmem:[%s196] sm:$0xf]
          %v322 = vpack.c.bf16 %v321, %v321
          %v325 = vunpack.c.l.s4 1983009808
          %v326 = vunpack.c.0.s8 %v325
          %v327 = vlaneseq
          %v328 = vshrl.u32 %v327, 7
          %v329 = vsub.s32 %v326, %v328
          %v330 = vrot.slane %v322, %v329
          %331 = vrot.lane.b32.xlu0 %v330, 29
          %v332 = vpop.permute.xlu0 %331
          %vm334 = vcmask 1017704
          %335 = vst.msk [vmem:[#allocation2] sm:$0x3] %vm334, %v332
          %v336 = vld [vmem:[%s196] sm:$0xf]
          %v337 = vpack.c.bf16 %v336, %v336
          %v340 = vunpack.c.l.s4 1983009808
          %v341 = vunpack.c.0.s8 %v340
          %v342 = vlaneseq
          %v343 = vshrl.u32 %v342, 7
          %v344 = vsub.s32 %v341, %v343
          %v345 = vrot.slane %v337, %v344
          %346 = vrot.lane.b32.xlu0 %v345, 31
          %v347 = vpop.permute.xlu0 %346
          %v348 = vrot.slane %v347, 6
          %vm349 = vcmask 252928
          %v350 = vsel %vm349, %v348, %v347
          %vm352 = vcmask 1042424
          %vm353 = vcmask 117762
          %vm354 = vmor %vm353, %vm352
          %355 = vst.msk [vmem:[#allocation2] sm:$0xf] %vm354, %v350
          %v356 = vld [vmem:[%s196] sm:$0xf]
          %v357 = vpack.c.bf16 %v356, %v356
          %v360 = vunpack.c.l.s4 1983009808
          %v361 = vunpack.c.0.s8 %v360
          %v362 = vlaneseq
          %v363 = vshrl.u32 %v362, 7
          %v364 = vsub.s32 %v361, %v363
          %v365 = vrot.slane %v357, %v364
          %366 = vrot.lane.b32.xlu0 %v365, 33
          %v367 = vpop.permute.xlu0 %366
          %vm369 = vcmask 263304
          %370 = vst.msk [vmem:[#allocation2 + $0x2] sm:$0x3] %vm369, %v367
          %v371 = vld [vmem:[%s196 + $0x4] sm:$0xf]
          %v372 = vpack.c.bf16 %v371, %v371
          %v375 = vunpack.c.l.s4 1983009808
          %v376 = vunpack.c.0.s8 %v375
          %v377 = vlaneseq
          %v378 = vshrl.u32 %v377, 7
          %v379 = vsub.s32 %v376, %v378
          %v380 = vrot.slane %v372, %v379
          %381 = vrot.lane.b32.xlu0 %v380, 35
          %v382 = vpop.permute.xlu0 %381
          %vm384 = vcmask 410904
          %385 = vst.msk [vmem:[#allocation2 + $0x2] sm:$0x3] %vm384, %v382
          %v386 = vld [vmem:[%s196 + $0x4] sm:$0xf]
          %v387 = vpack.c.bf16 %v386, %v386
          %v390 = vunpack.c.l.s4 1983009808
          %v391 = vunpack.c.0.s8 %v390
          %v392 = vlaneseq
          %v393 = vshrl.u32 %v392, 7
          %v394 = vsub.s32 %v391, %v393
          %v395 = vrot.slane %v387, %v394
          %396 = vrot.lane.b32.xlu0 %v395, 37
          %v397 = vpop.permute.xlu0 %396
          %vm399 = vcmask 558504
          %400 = vst.msk [vmem:[#allocation2 + $0x2] sm:$0x3] %vm399, %v397
          %v401 = vld [vmem:[%s196 + $0x4] sm:$0xf]
          %v402 = vpack.c.bf16 %v401, %v401
          %v405 = vunpack.c.l.s4 1983009808
          %v406 = vunpack.c.0.s8 %v405
          %v407 = vlaneseq
          %v408 = vshrl.u32 %v407, 7
          %v409 = vsub.s32 %v406, %v408
          %v410 = vrot.slane %v402, %v409
          %411 = vrot.lane.b32.xlu0 %v410, 39
          %v412 = vpop.permute.xlu0 %411
          %vm414 = vcmask 706104
          %415 = vst.msk [vmem:[#allocation2 + $0x2] sm:$0x3] %vm414, %v412
          %v416 = vld [vmem:[%s196 + $0x4] sm:$0xf]
          %v417 = vpack.c.bf16 %v416, %v416
          %v420 = vunpack.c.l.s4 1983009808
          %v421 = vunpack.c.0.s8 %v420
          %v422 = vlaneseq
          %v423 = vshrl.u32 %v422, 7
          %v424 = vsub.s32 %v421, %v423
          %v425 = vrot.slane %v417, %v424
          %426 = vrot.lane.b32.xlu0 %v425, 41
          %v427 = vpop.permute.xlu0 %426
          %vm429 = vcmask 853704
          %430 = vst.msk [vmem:[#allocation2 + $0x2] sm:$0x3] %vm429, %v427
          %v431 = vld [vmem:[%s196 + $0x4] sm:$0xf]
          %v432 = vpack.c.bf16 %v431, %v431
          %v435 = vunpack.c.l.s4 1983009808
          %v436 = vunpack.c.0.s8 %v435
          %v437 = vlaneseq
          %v438 = vshrl.u32 %v437, 7
          %v439 = vsub.s32 %v436, %v438
          %v440 = vrot.slane %v432, %v439
          %441 = vrot.lane.b32.xlu0 %v440, 43
          %v442 = vpop.permute.xlu0 %441
          %vm444 = vcmask 1001304
          %445 = vst.msk [vmem:[#allocation2 + $0x2] sm:$0x3] %vm444, %v442
          %v446 = vld [vmem:[%s196 + $0x4] sm:$0xf]
          %v447 = vpack.c.bf16 %v446, %v446
          %v450 = vunpack.c.l.s4 1983009808
          %v451 = vunpack.c.0.s8 %v450
          %v452 = vlaneseq
          %v453 = vshrl.u32 %v452, 7
          %v454 = vsub.s32 %v451, %v453
          %v455 = vrot.slane %v447, %v454
          %456 = vrot.lane.b32.xlu0 %v455, 45
          %v457 = vpop.permute.xlu0 %456
          %v458 = vrot.slane %v457, 6
          %vm459 = vcmask 367616
          %v460 = vsel %vm459, %v458, %v457
          %vm462 = vcmask 1042408
          %vm463 = vcmask 101378
          %vm464 = vmor %vm463, %vm462
          %465 = vst.msk [vmem:[#allocation2 + $0x2] sm:$0xf] %vm464, %v460
          %v466 = vld [vmem:[%s196 + $0x4] sm:$0xf]
          %v467 = vpack.c.bf16 %v466, %v466
          %v470 = vunpack.c.l.s4 1983009808
          %v471 = vunpack.c.0.s8 %v470
          %v472 = vlaneseq
          %v473 = vshrl.u32 %v472, 7
          %v474 = vsub.s32 %v471, %v473
          %v475 = vrot.slane %v467, %v474
          %476 = vrot.lane.b32.xlu0 %v475, 47
          %v477 = vpop.permute.xlu0 %476
          %vm479 = vcmask 246904
          %480 = vst.msk [vmem:[#allocation2 + $0x4] sm:$0x3] %vm479, %v477
          %v481 = vld [vmem:[%s196 + $0x4] sm:$0xf]
          %v482 = vpack.c.bf16 %v481, %v481
          %v485 = vunpack.c.l.s4 1983009808
          %v486 = vunpack.c.0.s8 %v485
          %v487 = vlaneseq
          %v488 = vshrl.u32 %v487, 7
          %v489 = vsub.s32 %v486, %v488
          %v490 = vrot.slane %v482, %v489
          %491 = vrot.lane.b32.xlu0 %v490, 49
          %v492 = vpop.permute.xlu0 %491
          %vm494 = vcmask 394504
          %495 = vst.msk [vmem:[#allocation2 + $0x4] sm:$0x3] %vm494, %v492
          %v496 = vld [vmem:[#allocation2] sm:$0x3f]
          %v498 = vcombine.high %v496, %v496
          %v500 = vunpack.c.l.s4 1983009808
          %v501 = vunpack.c.0.s8 %v500
          %v502 = vlaneseq
          %v503 = vshrl.u32 %v502, 7
          %v504 = vsub.s32 %v501, %v503
          %v505 = vrot.slane %v496, %v504
          %v507 = vunpack.c.l.s4 1983009808
          %v508 = vunpack.c.0.s8 %v507
          %v509 = vlaneseq
          %v510 = vshrl.u32 %v509, 7
          %v511 = vsub.s32 %v508, %v510
          %v512 = vrot.slane %v498, %v511
          %515 = vst [vmem:[#allocation3] sm:$0x33] %v505
          %vm516 = vcmask 254976
          %517 = vst.msk [vmem:[#allocation3 + $0x8] sm:$0x3] %vm516, %v512
          %v518 = vld [vmem:[#allocation2] sm:$0x3f]
          %v520 = vcombine.low %v518, %v518
          %v522 = vunpack.c.l.s4 1983009808
          %v523 = vunpack.c.0.s8 %v522
          %v524 = vlaneseq
          %v525 = vshrl.u32 %v524, 7
          %v526 = vsub.s32 %v523, %v525
          %v527 = vrot.slane %v520, %v526
          %v529 = vunpack.c.l.s4 1983009808
          %v530 = vunpack.c.0.s8 %v529
          %v531 = vlaneseq
          %v532 = vshrl.u32 %v531, 7
          %v533 = vsub.s32 %v530, %v532
          %v534 = vrot.slane %v518, %v533
          %535 = vrot.lane.b32.xlu0 %v527, 127
          %v536 = vpop.permute.xlu0 %535
          %537 = vrot.lane.b32.xlu0 %v534, 127
          %v538 = vpop.permute.xlu0 %537
          %v539 = vrot.slane %v536, 4
          %v540 = vrot.slane %v538, 4
          %vm541 = vcmask 1043456
          %v542 = vsel %vm541, %v539, %v540
          %vm543 = vcmask 1039360
          %v544 = vsel %vm543, %v536, %v542
          %547 = vst [vmem:[#allocation3] sm:$0xcc] %v544
          %vm548 = vcmask 257026
          %549 = vst.msk [vmem:[#allocation3 + $0x8] sm:$0xc] %vm548, %v538
          %v550 = vld [vmem:[#allocation2] sm:$0x3f]
          %v552 = vcombine.high %v550, %v550
          %v554 = vunpack.c.l.s4 1983009808
          %v555 = vunpack.c.0.s8 %v554
          %v556 = vlaneseq
          %v557 = vshrl.u32 %v556, 7
          %v558 = vsub.s32 %v555, %v557
          %v559 = vrot.slane %v550, %v558
          %v561 = vunpack.c.l.s4 1983009808
          %v562 = vunpack.c.0.s8 %v561
          %v563 = vlaneseq
          %v564 = vshrl.u32 %v563, 7
          %v565 = vsub.s32 %v562, %v564
          %v566 = vrot.slane %v552, %v565
          %567 = vrot.lane.b32.xlu0 %v559, 126
          %v568 = vpop.permute.xlu0 %567
          %569 = vrot.lane.b32.xlu0 %v566, 126
          %v570 = vpop.permute.xlu0 %569
          %v571 = vrot.slane %v568, 4
          %v572 = vrot.slane %v570, 4
          %v573 = vsel %vm541, %v571, %v572
          %vm574 = vcmask 1031168
          %v575 = vsel %vm574, %v568, %v573
          %578 = vst [vmem:[#allocation3 + $0xc] sm:$0x33] %v575
          %579 = vst.msk [vmem:[#allocation3 + $0x14] sm:$0x3] %vm516, %v570
          %v580 = vld [vmem:[#allocation2] sm:$0x3f]
          %v582 = vcombine.low %v580, %v580
          %v584 = vunpack.c.l.s4 1983009808
          %v585 = vunpack.c.0.s8 %v584
          %v586 = vlaneseq
          %v587 = vshrl.u32 %v586, 7
          %v588 = vsub.s32 %v585, %v587
          %v589 = vrot.slane %v582, %v588
          %v591 = vunpack.c.l.s4 1983009808
          %v592 = vunpack.c.0.s8 %v591
          %v593 = vlaneseq
          %v594 = vshrl.u32 %v593, 7
          %v595 = vsub.s32 %v592, %v594
          %v596 = vrot.slane %v580, %v595
          %597 = vrot.lane.b32.xlu0 %v589, 110
          %v598 = vpop.permute.xlu0 %597
          %599 = vrot.lane.b32.xlu0 %v596, 110
          %v600 = vpop.permute.xlu0 %599
          %v601 = vrot.slane %v598, 4
          %v602 = vrot.slane %v600, 4
          %v603 = vsel %vm541, %v601, %v602
          %vm604 = vcmask 900096
          %v605 = vsel %vm604, %v598, %v603
          %608 = vst [vmem:[#allocation3 + $0xc] sm:$0xcc] %v605
          %609 = vst.msk [vmem:[#allocation3 + $0x14] sm:$0xc] %vm548, %v600
          %v610 = vld [vmem:[#allocation2] sm:$0x3f]
          %v612 = vcombine.high %v610, %v610
          %v614 = vunpack.c.l.s4 1983009808
          %v615 = vunpack.c.0.s8 %v614
          %v616 = vlaneseq
          %v617 = vshrl.u32 %v616, 7
          %v618 = vsub.s32 %v615, %v617
          %v619 = vrot.slane %v610, %v618
          %v621 = vunpack.c.l.s4 1983009808
          %v622 = vunpack.c.0.s8 %v621
          %v623 = vlaneseq
          %v624 = vshrl.u32 %v623, 7
          %v625 = vsub.s32 %v622, %v624
          %v626 = vrot.slane %v612, %v625
          %627 = vrot.lane.b32.xlu0 %v619, 109
          %v628 = vpop.permute.xlu0 %627
          %629 = vrot.lane.b32.xlu0 %v626, 109
          %v630 = vpop.permute.xlu0 %629
          %v631 = vrot.slane %v628, 4
          %v632 = vrot.slane %v630, 4
          %v633 = vsel %vm541, %v631, %v632
          %vm634 = vcmask 891904
          %v635 = vsel %vm634, %v628, %v633
          %638 = vst [vmem:[#allocation3 + $0x18] sm:$0x33] %v635
          %639 = vst.msk [vmem:[#allocation3 + $0x20] sm:$0x3] %vm516, %v630
          %v640 = vld [vmem:[#allocation2] sm:$0x3f]
          %v642 = vcombine.low %v640, %v640
          %v644 = vunpack.c.l.s4 1983009808
          %v645 = vunpack.c.0.s8 %v644
          %v646 = vlaneseq
          %v647 = vshrl.u32 %v646, 7
          %v648 = vsub.s32 %v645, %v647
          %v649 = vrot.slane %v642, %v648
          %v651 = vunpack.c.l.s4 1983009808
          %v652 = vunpack.c.0.s8 %v651
          %v653 = vlaneseq
          %v654 = vshrl.u32 %v653, 7
          %v655 = vsub.s32 %v652, %v654
          %v656 = vrot.slane %v640, %v655
          %657 = vrot.lane.b32.xlu0 %v649, 108
          %v658 = vpop.permute.xlu0 %657
          %659 = vrot.lane.b32.xlu0 %v656, 108
          %v660 = vpop.permute.xlu0 %659
          %v661 = vrot.slane %v658, 4
          %v662 = vrot.slane %v660, 4
          %v663 = vsel %vm541, %v661, %v662
          %vm664 = vcmask 883712
          %v665 = vsel %vm664, %v658, %v663
          %668 = vst [vmem:[#allocation3 + $0x18] sm:$0xcc] %v665
          %669 = vst.msk [vmem:[#allocation3 + $0x20] sm:$0xc] %vm548, %v660
          %v670 = vld [vmem:[#allocation2] sm:$0x3f]
          %v672 = vcombine.high %v670, %v670
          %v674 = vunpack.c.l.s4 1983009808
          %v675 = vunpack.c.0.s8 %v674
          %v676 = vlaneseq
          %v677 = vshrl.u32 %v676, 7
          %v678 = vsub.s32 %v675, %v677
          %v679 = vrot.slane %v670, %v678
          %v681 = vunpack.c.l.s4 1983009808
          %v682 = vunpack.c.0.s8 %v681
          %v683 = vlaneseq
          %v684 = vshrl.u32 %v683, 7
          %v685 = vsub.s32 %v682, %v684
          %v686 = vrot.slane %v672, %v685
          %687 = vrot.lane.b32.xlu0 %v679, 92
          %v688 = vpop.permute.xlu0 %687
          %689 = vrot.lane.b32.xlu0 %v686, 92
          %v690 = vpop.permute.xlu0 %689
          %v691 = vrot.slane %v688, 4
          %v692 = vrot.slane %v690, 4
          %v693 = vsel %vm541, %v691, %v692
          %vm694 = vcmask 752640
          %v695 = vsel %vm694, %v688, %v693
          %698 = vst [vmem:[#allocation3 + $0x24] sm:$0x33] %v695
          %699 = vst.msk [vmem:[#allocation3 + $0x2c] sm:$0x3] %vm516, %v690
          %v700 = vld [vmem:[#allocation2] sm:$0x3f]
          %v702 = vcombine.low %v700, %v700
          %v704 = vunpack.c.l.s4 1983009808
          %v705 = vunpack.c.0.s8 %v704
          %v706 = vlaneseq
          %v707 = vshrl.u32 %v706, 7
          %v708 = vsub.s32 %v705, %v707
          %v709 = vrot.slane %v702, %v708
          %v711 = vunpack.c.l.s4 1983009808
          %v712 = vunpack.c.0.s8 %v711
          %v713 = vlaneseq
          %v714 = vshrl.u32 %v713, 7
          %v715 = vsub.s32 %v712, %v714
          %v716 = vrot.slane %v700, %v715
          %717 = vrot.lane.b32.xlu0 %v709, 91
          %v718 = vpop.permute.xlu0 %717
          %719 = vrot.lane.b32.xlu0 %v716, 91
          %v720 = vpop.permute.xlu0 %719
          %v721 = vrot.slane %v718, 4
          %v722 = vrot.slane %v720, 4
          %v723 = vsel %vm541, %v721, %v722
          %vm724 = vcmask 744448
          %v725 = vsel %vm724, %v718, %v723
          %728 = vst [vmem:[#allocation3 + $0x24] sm:$0xcc] %v725
          %729 = vst.msk [vmem:[#allocation3 + $0x2c] sm:$0xc] %vm548, %v720
          %v730 = vld [vmem:[#allocation2] sm:$0x3f]
          %v732 = vcombine.high %v730, %v730
          %v734 = vunpack.c.l.s4 1983009808
          %v735 = vunpack.c.0.s8 %v734
          %v736 = vlaneseq
          %v737 = vshrl.u32 %v736, 7
          %v738 = vsub.s32 %v735, %v737
          %v739 = vrot.slane %v730, %v738
          %v741 = vunpack.c.l.s4 1983009808
          %v742 = vunpack.c.0.s8 %v741
          %v743 = vlaneseq
          %v744 = vshrl.u32 %v743, 7
          %v745 = vsub.s32 %v742, %v744
          %v746 = vrot.slane %v732, %v745
          %747 = vrot.lane.b32.xlu0 %v739, 90
          %v748 = vpop.permute.xlu0 %747
          %749 = vrot.lane.b32.xlu0 %v746, 90
          %v750 = vpop.permute.xlu0 %749
          %v751 = vrot.slane %v748, 4
          %v752 = vrot.slane %v750, 4
          %v753 = vsel %vm541, %v751, %v752
          %vm754 = vcmask 736256
          %v755 = vsel %vm754, %v748, %v753
          %758 = vst [vmem:[#allocation3 + $0x30] sm:$0x33] %v755
          %759 = vst.msk [vmem:[#allocation3 + $0x38] sm:$0x3] %vm516, %v750
        $region40: #{tpu_custom_call.1} parent=31 // pred_fallthru
          _
        %v760 = vld [vmem:[%s230] sm:$0xf]
        %v761 = vld [vmem:[#allocation3] sm:$0xff]
        %v762 = vld [vmem:[#allocation3 + $0x8] sm:$0xf]
        %v763 = vld [vmem:[#allocation3 + $0xc] sm:$0xff]
        %v764 = vld [vmem:[#allocation3 + $0x14] sm:$0xf]
        %v765 = vld [vmem:[#allocation3 + $0x18] sm:$0xff]
        %v766 = vld [vmem:[#allocation3 + $0x20] sm:$0xf]
        %v767 = vld [vmem:[#allocation3 + $0x24] sm:$0xff]
        %v768 = vld [vmem:[#allocation3 + $0x2c] sm:$0xf]
        %v769 = vld [vmem:[#allocation3 + $0x30] sm:$0x33]
        %v770 = vld [vmem:[#allocation3 + $0x38] sm:$0x3]
        %v771 = vld [vmem:[%s234] sm:$0xff]
        %773 = vset.pattern.permute.xlu0 0
        %774 = vperm.xlu0 %773, %v771
        %v775 = vpop.permute.xlu0 %774
        %v787 = vunpack.c.l.b16 %v761
        %v788 = vunpack.c.h.b16 %v761
        %v789 = vunpack.c.l.b16 %v762
        %v790 = vunpack.c.l.b16 %v763
        %v791 = vunpack.c.h.b16 %v763
        %v792 = vunpack.c.l.b16 %v764
        %v793 = vunpack.c.l.b16 %v765
        %v794 = vunpack.c.h.b16 %v765
        %v795 = vunpack.c.l.b16 %v766
        %v796 = vunpack.c.l.b16 %v767
        %v797 = vunpack.c.h.b16 %v767
        %v798 = vunpack.c.l.b16 %v768
        %v799 = vunpack.c.l.b16 %v769
        %v800 = vunpack.c.h.b16 %v769
        %v801 = vunpack.c.l.b16 %v770
        %v802 = vpack.c.b16 %v790, %v787
        %v803 = vpack.c.b16 %v791, %v788
        %v804 = vpack.c.b16 %v792, %v789
        %v805 = vpack.c.b16 %v796, %v793
        %v806 = vpack.c.b16 %v797, %v794
        %v807 = vpack.c.b16 %v798, %v795
        %v808 = vpack.c.b16 %v799, %v799
        %v809 = vpack.c.b16 %v800, %v800
        %v810 = vpack.c.b16 %v801, %v801
        %vm817 = vcmask 293888
        %v819 = vsel %vm817, %v760, 0
        %vm821 = vcmask 1041408
        %v823 = vsel %vm821, %v808, 0
        %v826 = vsel %vm821, %v809, 0
        %v829 = vsel %vm821, %v810, 0
        %831 = vmatprep.subr.bf16.mxu0 0
        %832 = vmatpush1.bf16.msra.mxu0 0
        %833 = vmatprep.subr.bf16.mxu0 0
        %834 = vmatpush1.bf16.msra.mxu0 0
        %835 = vmatprep.subr.bf16.mxu0 0
        %836 = vmatpush1.bf16.msra.mxu0 0
        %837 = vmatprep.subr.bf16.mxu0 0
        %838 = vmatpush1.bf16.msra.mxu0 0
        %839 = vmatprep.subr.bf16.mxu0 0
        %840 = vmatpush1.bf16.msra.mxu0 0
        %841 = vmatprep.subr.bf16.mxu0 %v826
        %842 = vmatpush1.bf16.msra.mxu0 %v823
        %843 = vmatprep.subr.bf16.mxu0 %v806
        %844 = vmatpush1.bf16.msra.mxu0 %v805
        %845 = vmatprep.subr.bf16.mxu0 %v803
        %846 = vmatpush1.bf16.msra.mxu0 %v802
        %847 = vmatprep.subr.bf16.mxu0 0
        %848 = vmatpush2.bf16.msra.mxu0 0
        %849 = vmatprep.subr.bf16.mxu0 0
        %850 = vmatpush2.bf16.msra.mxu0 0
        %851 = vmatprep.subr.bf16.mxu0 0
        %852 = vmatpush2.bf16.msra.mxu0 0
        %853 = vmatprep.subr.bf16.mxu0 0
        %854 = vmatpush2.bf16.msra.mxu0 0
        %855 = vmatprep.subr.bf16.mxu0 0
        %856 = vmatpush2.bf16.msra.mxu0 0
        %857 = vmatprep.subr.bf16.mxu0 0
        %858 = vmatpush2.bf16.msra.mxu0 0
        %859 = vmatprep.subr.bf16.mxu0 0
        %860 = vmatpush2.bf16.msra.mxu0 0
        %861 = vmatprep.subr.bf16.mxu0 0
        %862 = vmatpush2.bf16.msra.mxu0 0
        %863 = vmatprep.mubr.bf16.mxu0 0
        %864 = vmatmul.mubr.bf16.gmra.mxu0 %v819
        %v865 = vpop.f32.mrf.mxu0
        %v866 = vadd.f32 %v775, %v865
        %v867 = vpop.f32.mrf.mxu0
        %v868 = vadd.f32 %v775, %v867
        %v869 = vpop.f32.mrf.mxu0
        %v870 = vpop.f32.mrf.mxu0
        %871 = vdwg.mxu0
        %872 = vmatprep.subr.bf16.mxu0 0
        %873 = vmatpush1.bf16.msra.mxu0 0
        %874 = vmatprep.subr.bf16.mxu0 0
        %875 = vmatpush1.bf16.msra.mxu0 0
        %876 = vmatprep.subr.bf16.mxu0 0
        %877 = vmatpush1.bf16.msra.mxu0 0
        %878 = vmatprep.subr.bf16.mxu0 0
        %879 = vmatpush1.bf16.msra.mxu0 0
        %880 = vmatprep.subr.bf16.mxu0 0
        %881 = vmatpush1.bf16.msra.mxu0 0
        %882 = vmatprep.subr.bf16.mxu0 0
        %883 = vmatpush1.bf16.msra.mxu0 %v829
        %884 = vmatprep.subr.bf16.mxu0 0
        %885 = vmatpush1.bf16.msra.mxu0 %v807
        %886 = vmatprep.subr.bf16.mxu0 0
        %887 = vmatpush1.bf16.msra.mxu0 %v804
        %888 = vmatprep.subr.bf16.mxu0 0
        %889 = vmatpush2.bf16.msra.mxu0 0
        %890 = vmatprep.subr.bf16.mxu0 0
        %891 = vmatpush2.bf16.msra.mxu0 0
        %892 = vmatprep.subr.bf16.mxu0 0
        %893 = vmatpush2.bf16.msra.mxu0 0
        %894 = vmatprep.subr.bf16.mxu0 0
        %895 = vmatpush2.bf16.msra.mxu0 0
        %896 = vmatprep.subr.bf16.mxu0 0
        %897 = vmatpush2.bf16.msra.mxu0 0
        %898 = vmatprep.subr.bf16.mxu0 0
        %899 = vmatpush2.bf16.msra.mxu0 0
        %900 = vmatprep.subr.bf16.mxu0 0
        %901 = vmatpush2.bf16.msra.mxu0 0
        %902 = vmatprep.subr.bf16.mxu0 0
        %903 = vmatpush2.bf16.msra.mxu0 0
        %904 = vmatprep.mubr.bf16.mxu0 0
        %905 = vmatmul.mubr.bf16.gmra.mxu0 %v819
        %v906 = vpop.f32.mrf.mxu0
        %v907 = vadd.f32 %v775, %v906
        %v908 = vpop.f32.mrf.mxu0
        %v909 = vpop.f32.mrf.mxu0
        %v910 = vpop.f32.mrf.mxu0
        %911 = vdwg.mxu0
        %vm912 = vcmask 130048
        %913 = vst.msk [vmem:[%s226] sm:$0xff] %vm912, %v866
        %915 = vrot.lane.b32.xlu0 %v866, 126
        %v916 = vpop.permute.xlu0 %915
        %vm918 = vcmask 261248
        %919 = vst.msk [vmem:[%s226] sm:$0xff] %vm918, %v916
        %920 = vrot.lane.b32.xlu0 %v866, 124
        %v921 = vpop.permute.xlu0 %920
        %vm923 = vcmask 392448
        %924 = vst.msk [vmem:[%s226] sm:$0xff] %vm923, %v921
        %925 = vrot.lane.b32.xlu0 %v866, 122
        %v926 = vpop.permute.xlu0 %925
        %vm928 = vcmask 523648
        %929 = vst.msk [vmem:[%s226] sm:$0xff] %vm928, %v926
        %930 = vrot.lane.b32.xlu0 %v866, 120
        %v931 = vpop.permute.xlu0 %930
        %vm933 = vcmask 654848
        %934 = vst.msk [vmem:[%s226] sm:$0xff] %vm933, %v931
        %935 = vrot.lane.b32.xlu0 %v866, 118
        %v936 = vpop.permute.xlu0 %935
        %vm938 = vcmask 786048
        %939 = vst.msk [vmem:[%s226] sm:$0xff] %vm938, %v936
        %940 = vrot.lane.b32.xlu0 %v866, 116
        %v941 = vpop.permute.xlu0 %940
        %vm943 = vcmask 917248
        %944 = vst.msk [vmem:[%s226] sm:$0xff] %vm943, %v941
        %946 = vrot.lane.b32.xlu0 %v866, 114
        %v947 = vpop.permute.xlu0 %946
        %948 = vrot.lane.b32.xlu0 %v868, 114
        %v949 = vpop.permute.xlu0 %948
        %vm950 = vcmask 932864
        %v951 = vsel %vm950, %v947, %v949
        %vm953 = vcmask 1048448
        %954 = vst.msk [vmem:[%s226] sm:$0xff] %vm953, %v951
        %955 = vrot.lane.b32.xlu0 %v868, 112
        %v956 = vpop.permute.xlu0 %955
        %958 = vst.msk [vmem:[%s226 + $0x8] sm:$0xff] %vm912, %v956
        %959 = vrot.lane.b32.xlu0 %v868, 110
        %v960 = vpop.permute.xlu0 %959
        %962 = vst.msk [vmem:[%s226 + $0x8] sm:$0xff] %vm918, %v960
        %963 = vrot.lane.b32.xlu0 %v868, 108
        %v964 = vpop.permute.xlu0 %963
        %966 = vst.msk [vmem:[%s226 + $0x8] sm:$0xff] %vm923, %v964
        %967 = vrot.lane.b32.xlu0 %v868, 106
        %v968 = vpop.permute.xlu0 %967
        %970 = vst.msk [vmem:[%s226 + $0x8] sm:$0xff] %vm928, %v968
        %971 = vrot.lane.b32.xlu0 %v868, 104
        %v972 = vpop.permute.xlu0 %971
        %974 = vst.msk [vmem:[%s226 + $0x8] sm:$0xff] %vm933, %v972
        %975 = vrot.lane.b32.xlu0 %v868, 102
        %v976 = vpop.permute.xlu0 %975
        %978 = vst.msk [vmem:[%s226 + $0x8] sm:$0xff] %vm938, %v976
        %980 = vrot.lane.b32.xlu0 %v868, 100
        %v981 = vpop.permute.xlu0 %980
        %982 = vrot.lane.b32.xlu0 %v907, 100
        %v983 = vpop.permute.xlu0 %982
        %vm984 = vcmask 818176
        %v985 = vsel %vm984, %v981, %v983
        %987 = vst.msk [vmem:[%s226 + $0x8] sm:$0xff] %vm943, %v985
        %988 = vrot.lane.b32.xlu0 %v907, 98
        %v989 = vpop.permute.xlu0 %988
        %991 = vst.msk [vmem:[%s226 + $0x8] sm:$0xff] %vm953, %v989
        %s992 = sand.u32 %s120, 1
        %s993 = scalar_lea.sflag [#allocation6], %s992
        %s994 = sand.u32 %s120, 1
        %s995 = smul.addr %s994, 16
        %s996 = scalar_lea.vmem [#allocation7], %s995
        // Predicated region
        $region41: #{tpu_custom_call.1} parent=31 // pred_check
          %p997 = pneg %p130
        $region42: #{tpu_custom_call.1} parent=31 // pred_check_branch
          %999 = sbr.rel (%p997) target = $region44
        $region43: #{tpu_custom_call.1} parent=31 // pred_region
          %s1001 = ssub.s32 256, 256
          %1002 = vsyncadd %s993, %s1001
          %s1003 = smul.addr %s25, 2
          %s1004 = smul.addr %s24, 2
          %s1005 = sadd.s32 %s1003, %s1004
          %s1006 = smul.addr %s1005, 128
          %s1007 = scalar_lea.hbm %s3, %s1006
          %s1009 = sshll.u32 %s996, 4
          %s1010 = int_to_ptr.vmem [resolvable:$true] %s1009
          %1012 = dma.vmem_to_hbm [thread:$0]  %s1010, 256, %s1007, %s993
        $region44: #{tpu_custom_call.1} parent=31 // pred_fallthru
          _
      $region32: #{tpu_custom_call.1} parent=5 // pred_fallthru
        _
      %p1013 = scmp.le.s32.totalorder 2, %s15
      // Predicated region
      $region45: #{tpu_custom_call.1} parent=5 // pred_check
        %p1014 = pneg %p1013
      $region46: #{tpu_custom_call.1} parent=5 // pred_check_branch
        %1016 = sbr.rel (%p1014) target = $region48
      $region47: #{tpu_custom_call.1} parent=5 // pred_region
        %s1017 = ssub.s32 %s15, 2
        // Predicated region
        $region49: #{tpu_custom_call.1} parent=47 // pred_check
          %p1018 = pneg %p136
        $region50: #{tpu_custom_call.1} parent=47 // pred_check_branch
          %1020 = sbr.rel (%p1018) target = $region52
        $region51: #{tpu_custom_call.1} parent=47 // pred_region
          %s1021 = sand.u32 %s121, 1
          %s1022 = scalar_lea.sflag [#allocation6], %s1021
          %s1023 = sand.u32 %s121, 1
          %s1024 = smul.addr %s1023, 16
          %s1025 = scalar_lea.vmem [#allocation7], %s1024
          %1026 = dma.done %s1022, 256
        $region52: #{tpu_custom_call.1} parent=47 // pred_fallthru
          _
      $region48: #{tpu_custom_call.1} parent=5 // pred_fallthru
        _
    $region6: #{tpu_custom_call.1} parent=1 // loop_footer
      %s19 = sadd.s32 1, %s15
    $region7: #{tpu_custom_call.1} parent=1 // loop_footer_branch
      %14 = sbr.rel target = $region3
    $region8: #{tpu_custom_call.1} parent=1 // loop_exit
      _
    %1027 = vsyncpa [#allocation5], 1
    %s1028 = scalar_lea.sflag [#allocation5], 1
    %1029 = vsyncpa %s1028, 1
    %1030 = vsyncpa [#allocation6], 1
    %s1031 = scalar_lea.sflag [#allocation6], 1
    %1032 = vsyncpa %s1031, 1

</llo_original>
